<compile_context>
chip_gen: v6e
topology: v6e:2x2x1
jax: 0.10.0
libtpu: 0.0.40
codegen_flags: <defaults>
</compile_context>

<pallas_src>
import jax
import jax.numpy as jnp
import numpy as np
from jax.experimental import pallas as pl
from jax.experimental.pallas import tpu as pltpu

EPS = 1e-5                       # nn.BatchNorm2d default eps
VMEM_LIMIT_BYTES = 32 * 1024 * 1024


# ----------------------------- helpers ------------------------------------

def _shift_masks(height, width):
    """(9, H*W) 0/1 masks: validity of pixel (y+dh, x+dw) for each 3x3 tap."""
    ys, xs = np.meshgrid(np.arange(height), np.arange(width), indexing="ij")
    rows = []
    for dh in (-1, 0, 1):
        for dw in (-1, 0, 1):
            valid = ((ys + dh >= 0) & (ys + dh < height) &
                     (xs + dw >= 0) & (xs + dw < width))
            rows.append(valid.reshape(-1))
    return np.stack(rows, axis=0).astype(np.float32)


def _conv3x3(z, masks, w_ref, stack_ref, height, width):
    """SAME 3x3 conv of one (C, H*W) image: in-VMEM im2col + one MXU matmul.

    z:         (C, H*W) float32 activations (pixels on lanes)
    masks:     (9, H*W) float32 border-validity masks
    w_ref:     (O, 9*C) bfloat16 weights, column order (kh, kw, c)
    stack_ref: (9*C, H*W) float32 VMEM scratch (the 9 shifted/masked taps)
    """
    hw = height * width
    c = z.shape[0]
    k = 0
    for dh in (-1, 0, 1):
        for dw in (-1, 0, 1):
            off = dh * width + dw
            if off == 0:
                src = z                                     # centre tap
            else:
                src = pltpu.roll(z, (-off) % hw, axis=1) * masks[k:k + 1, :]
            stack_ref[k * c:(k + 1) * c, :] = src
            k += 1
    return jnp.dot(w_ref[...], stack_ref[...].astype(jnp.bfloat16),
                   preferred_element_type=jnp.float32)


# ----------------------------- kernels ------------------------------------

def _make_stats_kernel(count, num_pairs):
    """Per-channel batch stats of x -> (scale, shift) for `num_pairs` norms."""
    inv_n = 1.0 / float(count)

    def kernel(x_ref, gb_ref, ss_ref, sum_ref, sq_ref):
        i = pl.program_id(0)

        @pl.when(i == 0)
        def _init():
            sum_ref[...] = jnp.zeros_like(sum_ref)
            sq_ref[...] = jnp.zeros_like(sq_ref)

        x = x_ref[0]                                        # (C, H*W)
        sum_ref[...] += jnp.sum(x, axis=1, keepdims=True)
        sq_ref[...] += jnp.sum(x * x, axis=1, keepdims=True)

        @pl.when(i == pl.num_programs(0) - 1)
        def _finalize():
            mean = sum_ref[...] * inv_n                     # (C, 1)
            var = sq_ref[...] * inv_n - mean * mean         # biased variance
            rstd = jax.lax.rsqrt(var + EPS)
            for p in range(num_pairs):
                g = gb_ref[:, 2 * p:2 * p + 1]
                b = gb_ref[:, 2 * p + 1:2 * p + 2]
                sc = g * rstd
                ss_ref[:, 2 * p:2 * p + 1] = sc
                ss_ref[:, 2 * p + 1:2 * p + 2] = b - mean * sc

    return kernel


def _make_stage1_kernel(height, width, count):
    """BN2 + ReLU + conv2 (3x3) -> t (bf16), plus batch stats of t -> norm4."""
    inv_n = 1.0 / float(count)

    def kernel(x_ref, masks_ref, ss_ref, gb4_ref, w2_ref,
               t_ref, ss4_ref, stack_ref, sum_ref, sq_ref):
        i = pl.program_id(0)

        @pl.when(i == 0)
        def _init():
            sum_ref[...] = jnp.zeros_like(sum_ref)
            sq_ref[...] = jnp.zeros_like(sq_ref)

        x = x_ref[0]                                        # (C, H*W) f32
        masks = masks_ref[...]                              # (9, H*W) f32

        # norm2 -> ReLU -> conv2 (3x3, in-kernel shifted im2col)
        z2 = jnp.maximum(x * ss_ref[:, 2:3] + ss_ref[:, 3:4], 0.0)
        t = _conv3x3(z2, masks, w2_ref, stack_ref, height, width)
        t_ref[0] = t.astype(t_ref.dtype)                    # bf16 HBM store

        # accumulate batch stats of t (in f32) for norm4
        sum_ref[...] += jnp.sum(t, axis=1, keepdims=True)
        sq_ref[...] += jnp.sum(t * t, axis=1, keepdims=True)

        @pl.when(i == pl.num_programs(0) - 1)
        def _finalize():
            mean = sum_ref[...] * inv_n
            var = sq_ref[...] * inv_n - mean * mean
            rstd = jax.lax.rsqrt(var + EPS)
            sc = gb4_ref[:, 0:1] * rstd
            ss4_ref[:, 0:1] = sc
            ss4_ref[:, 1:2] = gb4_ref[:, 1:2] - mean * sc

    return kernel


def _make_stage2_kernel(height, width):
    """out = x + conv1(relu(norm1(x))) + conv4(relu(norm4(t)))."""

    def kernel(x_ref, t_ref, masks_ref, ss12_ref, ss4_ref, w1_ref, w4_ref,
               o_ref, stack_ref):
        x = x_ref[0]                                        # (C, H*W) f32
        t = t_ref[0].astype(jnp.float32)                    # (C, H*W) from bf16
        masks = masks_ref[...]

        # branch 1: norm1 -> ReLU -> conv1 (1x1) -- cheap recompute, saves a
        # full HBM write+read of the (x + out1) partial residual.
        z1 = jnp.maximum(x * ss12_ref[:, 0:1] + ss12_ref[:, 1:2], 0.0)
        out1 = jnp.dot(w1_ref[...], z1.astype(jnp.bfloat16),
                       preferred_element_type=jnp.float32)

        # branch 2 (second half): norm4 -> ReLU -> conv4 (3x3)
        z4 = jnp.maximum(t * ss4_ref[:, 0:1] + ss4_ref[:, 1:2], 0.0)
        out2 = _conv3x3(z4, masks, w4_ref, stack_ref, height, width)

        o_ref[0] = x + out1 + out2

    return kernel


# ----------------------------- wrapper ------------------------------------

def four_conv_res_block(x_nchw, params):
    """Forward pass of FourConvResBlock (training-mode BatchNorm semantics)."""
    n, c, h, w = x_nchw.shape
    o = params["w1"].shape[0]
    assert o == c, "residual add requires in_channels == out_channels"
    hw = h * w
    f32 = jnp.float32
    bf16 = jnp.bfloat16

    # native NCHW: channels on sublanes, flattened pixels on lanes
    x3d = x_nchw.reshape(n, c, hw).astype(f32)

    # per-channel affine params, stacked as (C, k) columns
    gb12 = jnp.stack([params["gamma1"], params["beta1"],
                      params["gamma2"], params["beta2"]], axis=1).astype(f32)
    gb4 = jnp.stack([params["gamma4"], params["beta4"]], axis=1).astype(f32)

    # weights: 1x1 as (O, C); 3x3 as (O, 9*C) with column order (kh, kw, c)
    w1m = params["w1"].reshape(o, c).astype(bf16)
    w2m = jnp.transpose(params["w2"], (0, 2, 3, 1)).reshape(o, 9 * c).astype(bf16)
    w4m = jnp.transpose(params["w4"], (0, 2, 3, 1)).reshape(o, 9 * c).astype(bf16)

    masks = jnp.asarray(_shift_masks(h, w))                 # (9, H*W) f32

    cp_arb = pltpu.CompilerParams(dimension_semantics=("arbitrary",),
                                  vmem_limit_bytes=VMEM_LIMIT_BYTES)
    cp_par = pltpu.CompilerParams(dimension_semantics=("parallel",),
                                  vmem_limit_bytes=VMEM_LIMIT_BYTES)

    # pass 1: batch stats of x -> scale/shift for norm1 & norm2 (cross-tile)
    ss12 = pl.pallas_call(
        _make_stats_kernel(n * hw, 2),
        grid=(n,),
        in_specs=[pl.BlockSpec((1, c, hw), lambda i: (i, 0, 0)),
                  pl.BlockSpec((c, 4), lambda i: (0, 0))],
        out_specs=pl.BlockSpec((c, 4), lambda i: (0, 0)),
        out_shape=jax.ShapeDtypeStruct((c, 4), f32),
        scratch_shapes=[pltpu.VMEM((c, 1), f32), pltpu.VMEM((c, 1), f32)],
        compiler_params=cp_arb,
    )(x3d, gb12)

    # pass 2: BN2/ReLU/conv2 -> t (bf16), batch stats of t -> norm4 params
    t, ss4 = pl.pallas_call(
        _make_stage1_kernel(h, w, n * hw),
        grid=(n,),
        in_specs=[pl.BlockSpec((1, c, hw), lambda i: (i, 0, 0)),
                  pl.BlockSpec((9, hw), lambda i: (0, 0)),
                  pl.BlockSpec((c, 4), lambda i: (0, 0)),
                  pl.BlockSpec((c, 2), lambda i: (0, 0)),
                  pl.BlockSpec((o, 9 * c), lambda i: (0, 0))],
        out_specs=(pl.BlockSpec((1, o, hw), lambda i: (i, 0, 0)),
                   pl.BlockSpec((o, 2), lambda i: (0, 0))),
        out_shape=(jax.ShapeDtypeStruct((n, o, hw), bf16),
                   jax.ShapeDtypeStruct((o, 2), f32)),
        scratch_shapes=[pltpu.VMEM((9 * c, hw), f32),
                        pltpu.VMEM((o, 1), f32), pltpu.VMEM((o, 1), f32)],
        compiler_params=cp_arb,
    )(x3d, masks, ss12, gb4, w2m)

    # pass 3: conv1 branch (recomputed), BN4/ReLU/conv4, final residual add
    out3d = pl.pallas_call(
        _make_stage2_kernel(h, w),
        grid=(n,),
        in_specs=[pl.BlockSpec((1, c, hw), lambda i: (i, 0, 0)),
                  pl.BlockSpec((1, o, hw), lambda i: (i, 0, 0)),
                  pl.BlockSpec((9, hw), lambda i: (0, 0)),
                  pl.BlockSpec((c, 4), lambda i: (0, 0)),
                  pl.BlockSpec((o, 2), lambda i: (0, 0)),
                  pl.BlockSpec((o, c), lambda i: (0, 0)),
                  pl.BlockSpec((o, 9 * c), lambda i: (0, 0))],
        out_specs=pl.BlockSpec((1, o, hw), lambda i: (i, 0, 0)),
        out_shape=jax.ShapeDtypeStruct((n, o, hw), f32),
        scratch_shapes=[pltpu.VMEM((9 * c, hw), f32)],
        compiler_params=cp_par,
    )(x3d, t, masks, ss12, ss4, w1m, w4m)

    return out3d.reshape(n, o, h, w)


# ------------------------- params / reference ------------------------------

def init_params(key, c):
    ks = jax.random.split(key, 9)
    return {
        "gamma1": 1.0 + 0.1 * jax.random.normal(ks[0], (c,), jnp.float32),
        "beta1": 0.1 * jax.random.normal(ks[1], (c,), jnp.float32),
        "gamma2": 1.0 + 0.1 * jax.random.normal(ks[2], (c,), jnp.float32),
        "beta2": 0.1 * jax.random.normal(ks[3], (c,), jnp.float32),
        "gamma4": 1.0 + 0.1 * jax.random.normal(ks[4], (c,), jnp.float32),
        "beta4": 0.1 * jax.random.normal(ks[5], (c,), jnp.float32),
        "w1": 0.3 * jax.random.normal(ks[6], (c, c, 1, 1), jnp.float32),
        "w2": 0.3 * jax.random.normal(ks[7], (c, c, 3, 3), jnp.float32),
        "w4": 0.3 * jax.random.normal(ks[8], (c, c, 3, 3), jnp.float32),
    }


def reference(x, params):
    """Pure-JAX (XLA) reference mirroring the PyTorch forward."""
    def bn(v, g, b):
        mean = jnp.mean(v, axis=(0, 2, 3), keepdims=True)
        var = jnp.mean(v * v, axis=(0, 2, 3), keepdims=True) - mean * mean
        return ((v - mean) * jax.lax.rsqrt(var + EPS)
                * g.reshape(1, -1, 1, 1) + b.reshape(1, -1, 1, 1))

    def conv(v, w, pad):
        return jax.lax.conv_general_dilated(
            v, w, (1, 1), ((pad, pad), (pad, pad)),
            dimension_numbers=("NCHW", "OIHW", "NCHW"),
            precision=jax.lax.Precision.HIGHEST)

    out1 = conv(jnp.maximum(bn(x, params["gamma1"], params["beta1"]), 0.0),
                params["w1"], 0)
    t = conv(jnp.maximum(bn(x, params["gamma2"], params["beta2"]), 0.0),
             params["w2"], 1)
    out2 = conv(jnp.maximum(bn(t, params["gamma4"], params["beta4"]), 0.0),
                params["w4"], 1)
    return x + out1 + out2


if __name__ == "__main__":
    key = jax.random.PRNGKey(0)
    kx, kp = jax.random.split(key)
    N, C, H, W = 2, 8, 16, 16            # in_channels == out_channels == 8
    x = jax.random.normal(kx, (N, C, H, W), jnp.float32)
    params = init_params(kp, C)

    out = jax.jit(four_conv_res_block)(x, params)
    out = jax.block_until_ready(out)

    ref = reference(x, params)
    assert out.shape == x.shape and out.dtype == jnp.float32
    assert bool(jnp.all(jnp.isfinite(out))), "non-finite output"
    max_ref = float(jnp.max(jnp.abs(ref)))
    max_diff = float(jnp.max(jnp.abs(out - ref)))
    # tolerance: bf16 MXU operands + bf16 intermediate t, f32 accumulation
    assert max_diff <= 0.02 * max_ref + 0.05, (
        f"mismatch vs reference: max |diff| = {max_diff} (max |ref| = {max_ref})")
    print("KERNEL_OK")
</pallas_src>

<mosaic_0001>
module attributes {stable_mosaic.version = 11 : i64} {
  func.func @kernel(%arg0: i32, %arg1: memref<1x8x256xf32, #tpu.memory_space<vmem>>, %arg2: memref<8x4xf32, #tpu.memory_space<vmem>>, %arg3: memref<8x4xf32, #tpu.memory_space<vmem>>, %arg4: memref<8x1xf32, #tpu.memory_space<vmem>>, %arg5: memref<8x1xf32, #tpu.memory_space<vmem>>) attributes {dimension_semantics = [#tpu.dimension_semantics<arbitrary>], iteration_bounds = array<i64: 2>, scalar_prefetch = 0 : i64, scratch_operands = 2 : i64, tpu.core_type = #tpu.core_type<tc>, window_params = [{transform_indices = @transform_0, window_bounds = array<i64: 1, 8, 256>}, {pipeline_mode = #tpu.pipeline_mode<synchronous>, transform_indices = @transform_1, window_bounds = array<i64: 8, 4>}, {pipeline_mode = #tpu.pipeline_mode<synchronous>, transform_indices = @transform_2, window_bounds = array<i64: 8, 4>}]} {
    %c0_i32 = arith.constant 0 : i32
    %0 = arith.cmpi eq, %arg0, %c0_i32 : i32
    %1 = arith.extui %0 : i1 to i32
    %c0_i32_0 = arith.constant 0 : i32
    %2 = arith.cmpi ne, %1, %c0_i32_0 : i32
    scf.if %2 {
      %cst_13 = arith.constant 0.000000e+00 : f32
      %19 = vector.broadcast %cst_13 : f32 to vector<8x1xf32>
      %c0_14 = arith.constant 0 : index
      %c0_15 = arith.constant 0 : index
      %20 = vector.load %arg4[%c0_14, %c0_15] : memref<8x1xf32, #tpu.memory_space<vmem>>, vector<8x1xf32>
      tpu.vector_store %arg4[%c0_14, %c0_15], %19 {strides = array<i32>} : memref<8x1xf32, #tpu.memory_space<vmem>>, vector<8x1xf32>,
      %cst_16 = arith.constant 0.000000e+00 : f32
      %21 = vector.broadcast %cst_16 : f32 to vector<8x1xf32>
      %c0_17 = arith.constant 0 : index
      %c0_18 = arith.constant 0 : index
      %22 = vector.load %arg5[%c0_17, %c0_18] : memref<8x1xf32, #tpu.memory_space<vmem>>, vector<8x1xf32>
      tpu.vector_store %arg5[%c0_17, %c0_18], %21 {strides = array<i32>} : memref<8x1xf32, #tpu.memory_space<vmem>>, vector<8x1xf32>,
    } else {
    }
    %c0 = arith.constant 0 : index
    %c0_1 = arith.constant 0 : index
    %c0_2 = arith.constant 0 : index
    %3 = vector.load %arg1[%c0, %c0_1, %c0_2] : memref<1x8x256xf32, #tpu.memory_space<vmem>>, vector<1x8x256xf32>
    %4 = vector.shape_cast %3 : vector<1x8x256xf32> to vector<8x256xf32>
    %c0_3 = arith.constant 0 : index
    %c0_4 = arith.constant 0 : index
    %5 = vector.load %arg4[%c0_3, %c0_4] : memref<8x1xf32, #tpu.memory_space<vmem>>, vector<8x1xf32>
    %cst = arith.constant dense<0.000000e+00> : vector<8xf32>
    %6 = vector.multi_reduction <add>, %4, %cst [1] : vector<8x256xf32> to vector<8xf32>
    %7 = vector.shape_cast %6 : vector<8xf32> to vector<8x1xf32>
    %8 = arith.addf %5, %7 : vector<8x1xf32>
    %c0_5 = arith.constant 0 : index
    %c0_6 = arith.constant 0 : index
    %9 = vector.load %arg4[%c0_5, %c0_6] : memref<8x1xf32, #tpu.memory_space<vmem>>, vector<8x1xf32>
    tpu.vector_store %arg4[%c0_5, %c0_6], %8 {strides = array<i32>} : memref<8x1xf32, #tpu.memory_space<vmem>>, vector<8x1xf32>,
    %c0_7 = arith.constant 0 : index
    %c0_8 = arith.constant 0 : index
    %10 = vector.load %arg5[%c0_7, %c0_8] : memref<8x1xf32, #tpu.memory_space<vmem>>, vector<8x1xf32>
    %11 = arith.mulf %4, %4 : vector<8x256xf32>
    %cst_9 = arith.constant dense<0.000000e+00> : vector<8xf32>
    %12 = vector.multi_reduction <add>, %11, %cst_9 [1] : vector<8x256xf32> to vector<8xf32>
    %13 = vector.shape_cast %12 : vector<8xf32> to vector<8x1xf32>
    %14 = arith.addf %10, %13 : vector<8x1xf32>
    %c0_10 = arith.constant 0 : index
    %c0_11 = arith.constant 0 : index
    %15 = vector.load %arg5[%c0_10, %c0_11] : memref<8x1xf32, #tpu.memory_space<vmem>>, vector<8x1xf32>
    tpu.vector_store %arg5[%c0_10, %c0_11], %14 {strides = array<i32>} : memref<8x1xf32, #tpu.memory_space<vmem>>, vector<8x1xf32>,
    %c1_i32 = arith.constant 1 : i32
    %16 = arith.cmpi eq, %arg0, %c1_i32 : i32
    %17 = arith.extui %16 : i1 to i32
    %c0_i32_12 = arith.constant 0 : i32
    %18 = arith.cmpi ne, %17, %c0_i32_12 : i32
    scf.if %18 {
      %c0_13 = arith.constant 0 : index
      %c0_14 = arith.constant 0 : index
      %19 = vector.load %arg4[%c0_13, %c0_14] : memref<8x1xf32, #tpu.memory_space<vmem>>, vector<8x1xf32>
      %cst_15 = arith.constant 0.001953125 : f32
      %20 = vector.broadcast %cst_15 : f32 to vector<8x1xf32>
      %21 = arith.mulf %19, %20 : vector<8x1xf32>
      %c0_16 = arith.constant 0 : index
      %c0_17 = arith.constant 0 : index
      %22 = vector.load %arg5[%c0_16, %c0_17] : memref<8x1xf32, #tpu.memory_space<vmem>>, vector<8x1xf32>
      %cst_18 = arith.constant 0.001953125 : f32
      %23 = vector.broadcast %cst_18 : f32 to vector<8x1xf32>
      %24 = arith.mulf %22, %23 : vector<8x1xf32>
      %25 = arith.mulf %21, %21 : vector<8x1xf32>
      %26 = arith.subf %24, %25 : vector<8x1xf32>
      %cst_19 = arith.constant 9.99999974E-6 : f32
      %27 = vector.broadcast %cst_19 : f32 to vector<8x1xf32>
      %28 = arith.addf %26, %27 : vector<8x1xf32>
      %29 = math.rsqrt %28 : vector<8x1xf32>
      %c0_20 = arith.constant 0 : index
      %c0_21 = arith.constant 0 : index
      %30 = vector.load %arg2[%c0_20, %c0_21] : memref<8x4xf32, #tpu.memory_space<vmem>>, vector<8x1xf32>
      %c0_22 = arith.constant 0 : index
      %c1 = arith.constant 1 : index
      %31 = vector.load %arg2[%c0_22, %c1] : memref<8x4xf32, #tpu.memory_space<vmem>>, vector<8x1xf32>
      %32 = arith.mulf %30, %29 : vector<8x1xf32>
      %c0_23 = arith.constant 0 : index
      %c0_24 = arith.constant 0 : index
      %33 = vector.load %arg3[%c0_23, %c0_24] : memref<8x4xf32, #tpu.memory_space<vmem>>, vector<8x1xf32>
      tpu.vector_store %arg3[%c0_23, %c0_24], %32 {strides = array<i32>} : memref<8x4xf32, #tpu.memory_space<vmem>>, vector<8x1xf32>,
      %34 = arith.mulf %21, %32 : vector<8x1xf32>
      %35 = arith.subf %31, %34 : vector<8x1xf32>
      %c0_25 = arith.constant 0 : index
      %c1_26 = arith.constant 1 : index
      %36 = vector.load %arg3[%c0_25, %c1_26] : memref<8x4xf32, #tpu.memory_space<vmem>>, vector<8x1xf32>
      tpu.vector_store %arg3[%c0_25, %c1_26], %35 {strides = array<i32>} : memref<8x4xf32, #tpu.memory_space<vmem>>, vector<8x1xf32>,
      %c0_27 = arith.constant 0 : index
      %c2 = arith.constant 2 : index
      %37 = vector.load %arg2[%c0_27, %c2] : memref<8x4xf32, #tpu.memory_space<vmem>>, vector<8x1xf32>
      %c0_28 = arith.constant 0 : index
      %c3 = arith.constant 3 : index
      %38 = vector.load %arg2[%c0_28, %c3] : memref<8x4xf32, #tpu.memory_space<vmem>>, vector<8x1xf32>
      %39 = arith.mulf %37, %29 : vector<8x1xf32>
      %c0_29 = arith.constant 0 : index
      %c2_30 = arith.constant 2 : index
      %40 = vector.load %arg3[%c0_29, %c2_30] : memref<8x4xf32, #tpu.memory_space<vmem>>, vector<8x1xf32>
      tpu.vector_store %arg3[%c0_29, %c2_30], %39 {strides = array<i32>} : memref<8x4xf32, #tpu.memory_space<vmem>>, vector<8x1xf32>,
      %41 = arith.mulf %21, %39 : vector<8x1xf32>
      %42 = arith.subf %38, %41 : vector<8x1xf32>
      %c0_31 = arith.constant 0 : index
      %c3_32 = arith.constant 3 : index
      %43 = vector.load %arg3[%c0_31, %c3_32] : memref<8x4xf32, #tpu.memory_space<vmem>>, vector<8x1xf32>
      tpu.vector_store %arg3[%c0_31, %c3_32], %42 {strides = array<i32>} : memref<8x4xf32, #tpu.memory_space<vmem>>, vector<8x1xf32>,
    } else {
    }
    return
  }
  func.func @transform_0(%arg0: i32) -> (i32, i32, i32) {
    %c0_i32 = arith.constant 0 : i32
    %c0_i32_0 = arith.constant 0 : i32
    %c0_i32_1 = arith.constant 0 : i32
    return %arg0, %c0_i32, %c0_i32_0 : i32, i32, i32
  }
  func.func @transform_1(%arg0: i32) -> (i32, i32) {
    %c0_i32 = arith.constant 0 : i32
    %c0_i32_0 = arith.constant 0 : i32
    %c0_i32_1 = arith.constant 0 : i32
    return %c0_i32, %c0_i32_0 : i32, i32
  }
  func.func @transform_2(%arg0: i32) -> (i32, i32) {
    %c0_i32 = arith.constant 0 : i32
    %c0_i32_0 = arith.constant 0 : i32
    %c0_i32_1 = arith.constant 0 : i32
    return %c0_i32, %c0_i32_0 : i32, i32
  }
}

module attributes {stable_mosaic.version = 11 : i64} {
  func.func @kernel(%arg0: i32, %arg1: memref<1x8x256xf32, #tpu.memory_space<vmem>>, %arg2: memref<1x8x256xbf16, #tpu.memory_space<vmem>>, %arg3: memref<9x256xf32, #tpu.memory_space<vmem>>, %arg4: memref<8x4xf32, #tpu.memory_space<vmem>>, %arg5: memref<8x2xf32, #tpu.memory_space<vmem>>, %arg6: memref<8x8xbf16, #tpu.memory_space<vmem>>, %arg7: memref<8x72xbf16, #tpu.memory_space<vmem>>, %arg8: memref<1x8x256xf32, #tpu.memory_space<vmem>>, %arg9: memref<72x256xf32, #tpu.memory_space<vmem>>) attributes {dimension_semantics = [#tpu.dimension_semantics<parallel>], iteration_bounds = array<i64: 2>, scalar_prefetch = 0 : i64, scratch_operands = 1 : i64, tpu.core_type = #tpu.core_type<tc>, window_params = [{transform_indices = @transform_0, window_bounds = array<i64: 1, 8, 256>}, {transform_indices = @transform_1, window_bounds = array<i64: 1, 8, 256>}, {pipeline_mode = #tpu.pipeline_mode<synchronous>, transform_indices = @transform_2, window_bounds = array<i64: 9, 256>}, {pipeline_mode = #tpu.pipeline_mode<synchronous>, transform_indices = @transform_3, window_bounds = array<i64: 8, 4>}, {pipeline_mode = #tpu.pipeline_mode<synchronous>, transform_indices = @transform_4, window_bounds = array<i64: 8, 2>}, {pipeline_mode = #tpu.pipeline_mode<synchronous>, transform_indices = @transform_5, window_bounds = array<i64: 8, 8>}, {pipeline_mode = #tpu.pipeline_mode<synchronous>, transform_indices = @transform_6, window_bounds = array<i64: 8, 72>}, {transform_indices = @transform_7, window_bounds = array<i64: 1, 8, 256>}]} {
    %c0 = arith.constant 0 : index
    %c0_0 = arith.constant 0 : index
    %c0_1 = arith.constant 0 : index
    %0 = vector.load %arg1[%c0, %c0_0, %c0_1] : memref<1x8x256xf32, #tpu.memory_space<vmem>>, vector<1x8x256xf32>
    %1 = vector.shape_cast %0 : vector<1x8x256xf32> to vector<8x256xf32>
    %c0_2 = arith.constant 0 : index
    %c0_3 = arith.constant 0 : index
    %c0_4 = arith.constant 0 : index
    %2 = vector.load %arg2[%c0_2, %c0_3, %c0_4] : memref<1x8x256xbf16, #tpu.memory_space<vmem>>, vector<1x8x256xbf16>
    %3 = vector.shape_cast %2 : vector<1x8x256xbf16> to vector<8x256xbf16>
    %4 = arith.extf %3 : vector<8x256xbf16> to vector<8x256xf32>
    %c0_5 = arith.constant 0 : index
    %c0_6 = arith.constant 0 : index
    %5 = vector.load %arg3[%c0_5, %c0_6] : memref<9x256xf32, #tpu.memory_space<vmem>>, vector<9x256xf32>
    %c0_7 = arith.constant 0 : index
    %c0_8 = arith.constant 0 : index
    %6 = vector.load %arg4[%c0_7, %c0_8] : memref<8x4xf32, #tpu.memory_space<vmem>>, vector<8x1xf32>
    %7 = vector.broadcast %6 : vector<8x1xf32> to vector<8x256xf32>
    %8 = arith.mulf %1, %7 : vector<8x256xf32>
    %c0_9 = arith.constant 0 : index
    %c1 = arith.constant 1 : index
    %9 = vector.load %arg4[%c0_9, %c1] : memref<8x4xf32, #tpu.memory_space<vmem>>, vector<8x1xf32>
    %10 = vector.broadcast %9 : vector<8x1xf32> to vector<8x256xf32>
    %11 = arith.addf %8, %10 : vector<8x256xf32>
    %cst = arith.constant 0.000000e+00 : f32
    %12 = vector.broadcast %cst : f32 to vector<8x256xf32>
    %13 = arith.maximumf %11, %12 : vector<8x256xf32>
    %c0_10 = arith.constant 0 : index
    %c0_11 = arith.constant 0 : index
    %14 = vector.load %arg6[%c0_10, %c0_11] : memref<8x8xbf16, #tpu.memory_space<vmem>>, vector<8x8xbf16>
    %15 = arith.truncf %13 : vector<8x256xf32> to vector<8x256xbf16>
    %cst_12 = arith.constant dense<0.000000e+00> : vector<8x256xf32>
    %16 = tpu.matmul %14, %15, %cst_12 {dimension_numbers = #tpu.dot_dimension_numbers<[1], [0], [0], [1], [0, 0, 1, 1], [], []>} : vector<8x8xbf16>, vector<8x256xbf16>, vector<8x256xf32> -> vector<8x256xf32>
    %c0_13 = arith.constant 0 : index
    %c0_14 = arith.constant 0 : index
    %17 = vector.load %arg5[%c0_13, %c0_14] : memref<8x2xf32, #tpu.memory_space<vmem>>, vector<8x1xf32>
    %18 = vector.broadcast %17 : vector<8x1xf32> to vector<8x256xf32>
    %19 = arith.mulf %4, %18 : vector<8x256xf32>
    %c0_15 = arith.constant 0 : index
    %c1_16 = arith.constant 1 : index
    %20 = vector.load %arg5[%c0_15, %c1_16] : memref<8x2xf32, #tpu.memory_space<vmem>>, vector<8x1xf32>
    %21 = vector.broadcast %20 : vector<8x1xf32> to vector<8x256xf32>
    %22 = arith.addf %19, %21 : vector<8x256xf32>
    %cst_17 = arith.constant 0.000000e+00 : f32
    %23 = vector.broadcast %cst_17 : f32 to vector<8x256xf32>
    %24 = arith.maximumf %22, %23 : vector<8x256xf32>
    %c17_i32 = arith.constant 17 : i32
    %25 = tpu.dynamic_rotate %24 by %c17_i32 dim 1 : vector<8x256xf32>, i32 -> vector<8x256xf32>
    %26 = vector.extract_strided_slice %5 {offsets = [0, 0], sizes = [1, 256], strides = [1, 1]} : vector<9x256xf32> to vector<1x256xf32>
    %27 = vector.broadcast %26 : vector<1x256xf32> to vector<8x256xf32>
    %28 = arith.mulf %25, %27 : vector<8x256xf32>
    %c0_18 = arith.constant 0 : index
    %c0_19 = arith.constant 0 : index
    %29 = vector.load %arg9[%c0_18, %c0_19] : memref<72x256xf32, #tpu.memory_space<vmem>>, vector<8x256xf32>
    tpu.vector_store %arg9[%c0_18, %c0_19], %28 {strides = array<i32>} : memref<72x256xf32, #tpu.memory_space<vmem>>, vector<8x256xf32>,
    %c16_i32 = arith.constant 16 : i32
    %30 = tpu.dynamic_rotate %24 by %c16_i32 dim 1 : vector<8x256xf32>, i32 -> vector<8x256xf32>
    %31 = vector.extract_strided_slice %5 {offsets = [1, 0], sizes = [1, 256], strides = [1, 1]} : vector<9x256xf32> to vector<1x256xf32>
    %32 = vector.broadcast %31 : vector<1x256xf32> to vector<8x256xf32>
    %33 = arith.mulf %30, %32 : vector<8x256xf32>
    %c8 = arith.constant 8 : index
    %c0_20 = arith.constant 0 : index
    %34 = vector.load %arg9[%c8, %c0_20] : memref<72x256xf32, #tpu.memory_space<vmem>>, vector<8x256xf32>
    tpu.vector_store %arg9[%c8, %c0_20], %33 {strides = array<i32>} : memref<72x256xf32, #tpu.memory_space<vmem>>, vector<8x256xf32>,
    %c15_i32 = arith.constant 15 : i32
    %35 = tpu.dynamic_rotate %24 by %c15_i32 dim 1 : vector<8x256xf32>, i32 -> vector<8x256xf32>
    %36 = vector.extract_strided_slice %5 {offsets = [2, 0], sizes = [1, 256], strides = [1, 1]} : vector<9x256xf32> to vector<1x256xf32>
    %37 = vector.broadcast %36 : vector<1x256xf32> to vector<8x256xf32>
    %38 = arith.mulf %35, %37 : vector<8x256xf32>
    %c16 = arith.constant 16 : index
    %c0_21 = arith.constant 0 : index
    %39 = vector.load %arg9[%c16, %c0_21] : memref<72x256xf32, #tpu.memory_space<vmem>>, vector<8x256xf32>
    tpu.vector_store %arg9[%c16, %c0_21], %38 {strides = array<i32>} : memref<72x256xf32, #tpu.memory_space<vmem>>, vector<8x256xf32>,
    %c1_i32 = arith.constant 1 : i32
    %40 = tpu.dynamic_rotate %24 by %c1_i32 dim 1 : vector<8x256xf32>, i32 -> vector<8x256xf32>
    %41 = vector.extract_strided_slice %5 {offsets = [3, 0], sizes = [1, 256], strides = [1, 1]} : vector<9x256xf32> to vector<1x256xf32>
    %42 = vector.broadcast %41 : vector<1x256xf32> to vector<8x256xf32>
    %43 = arith.mulf %40, %42 : vector<8x256xf32>
    %c24 = arith.constant 24 : index
    %c0_22 = arith.constant 0 : index
    %44 = vector.load %arg9[%c24, %c0_22] : memref<72x256xf32, #tpu.memory_space<vmem>>, vector<8x256xf32>
    tpu.vector_store %arg9[%c24, %c0_22], %43 {strides = array<i32>} : memref<72x256xf32, #tpu.memory_space<vmem>>, vector<8x256xf32>,
    %c32 = arith.constant 32 : index
    %c0_23 = arith.constant 0 : index
    %45 = vector.load %arg9[%c32, %c0_23] : memref<72x256xf32, #tpu.memory_space<vmem>>, vector<8x256xf32>
    tpu.vector_store %arg9[%c32, %c0_23], %24 {strides = array<i32>} : memref<72x256xf32, #tpu.memory_space<vmem>>, vector<8x256xf32>,
    %c255_i32 = arith.constant 255 : i32
    %46 = tpu.dynamic_rotate %24 by %c255_i32 dim 1 : vector<8x256xf32>, i32 -> vector<8x256xf32>
    %47 = vector.extract_strided_slice %5 {offsets = [5, 0], sizes = [1, 256], strides = [1, 1]} : vector<9x256xf32> to vector<1x256xf32>
    %48 = vector.broadcast %47 : vector<1x256xf32> to vector<8x256xf32>
    %49 = arith.mulf %46, %48 : vector<8x256xf32>
    %c40 = arith.constant 40 : index
    %c0_24 = arith.constant 0 : index
    %50 = vector.load %arg9[%c40, %c0_24] : memref<72x256xf32, #tpu.memory_space<vmem>>, vector<8x256xf32>
    tpu.vector_store %arg9[%c40, %c0_24], %49 {strides = array<i32>} : memref<72x256xf32, #tpu.memory_space<vmem>>, vector<8x256xf32>,
    %c241_i32 = arith.constant 241 : i32
    %51 = tpu.dynamic_rotate %24 by %c241_i32 dim 1 : vector<8x256xf32>, i32 -> vector<8x256xf32>
    %52 = vector.extract_strided_slice %5 {offsets = [6, 0], sizes = [1, 256], strides = [1, 1]} : vector<9x256xf32> to vector<1x256xf32>
    %53 = vector.broadcast %52 : vector<1x256xf32> to vector<8x256xf32>
    %54 = arith.mulf %51, %53 : vector<8x256xf32>
    %c48 = arith.constant 48 : index
    %c0_25 = arith.constant 0 : index
    %55 = vector.load %arg9[%c48, %c0_25] : memref<72x256xf32, #tpu.memory_space<vmem>>, vector<8x256xf32>
    tpu.vector_store %arg9[%c48, %c0_25], %54 {strides = array<i32>} : memref<72x256xf32, #tpu.memory_space<vmem>>, vector<8x256xf32>,
    %c240_i32 = arith.constant 240 : i32
    %56 = tpu.dynamic_rotate %24 by %c240_i32 dim 1 : vector<8x256xf32>, i32 -> vector<8x256xf32>
    %57 = vector.extract_strided_slice %5 {offsets = [7, 0], sizes = [1, 256], strides = [1, 1]} : vector<9x256xf32> to vector<1x256xf32>
    %58 = vector.broadcast %57 : vector<1x256xf32> to vector<8x256xf32>
    %59 = arith.mulf %56, %58 : vector<8x256xf32>
    %c56 = arith.constant 56 : index
    %c0_26 = arith.constant 0 : index
    %60 = vector.load %arg9[%c56, %c0_26] : memref<72x256xf32, #tpu.memory_space<vmem>>, vector<8x256xf32>
    tpu.vector_store %arg9[%c56, %c0_26], %59 {strides = array<i32>} : memref<72x256xf32, #tpu.memory_space<vmem>>, vector<8x256xf32>,
    %c239_i32 = arith.constant 239 : i32
    %61 = tpu.dynamic_rotate %24 by %c239_i32 dim 1 : vector<8x256xf32>, i32 -> vector<8x256xf32>
    %62 = vector.extract_strided_slice %5 {offsets = [8, 0], sizes = [1, 256], strides = [1, 1]} : vector<9x256xf32> to vector<1x256xf32>
    %63 = vector.broadcast %62 : vector<1x256xf32> to vector<8x256xf32>
    %64 = arith.mulf %61, %63 : vector<8x256xf32>
    %c64 = arith.constant 64 : index
    %c0_27 = arith.constant 0 : index
    %65 = vector.load %arg9[%c64, %c0_27] : memref<72x256xf32, #tpu.memory_space<vmem>>, vector<8x256xf32>
    tpu.vector_store %arg9[%c64, %c0_27], %64 {strides = array<i32>} : memref<72x256xf32, #tpu.memory_space<vmem>>, vector<8x256xf32>,
    %c0_28 = arith.constant 0 : index
    %c0_29 = arith.constant 0 : index
    %66 = vector.load %arg7[%c0_28, %c0_29] : memref<8x72xbf16, #tpu.memory_space<vmem>>, vector<8x72xbf16>
    %c0_30 = arith.constant 0 : index
    %c0_31 = arith.constant 0 : index
    %67 = vector.load %arg9[%c0_30, %c0_31] : memref<72x256xf32, #tpu.memory_space<vmem>>, vector<72x256xf32>
    %68 = arith.truncf %67 : vector<72x256xf32> to vector<72x256xbf16>
    %cst_32 = arith.constant dense<0.000000e+00> : vector<8x256xf32>
    %69 = tpu.matmul %66, %68, %cst_32 {dimension_numbers = #tpu.dot_dimension_numbers<[1], [0], [0], [1], [0, 0, 1, 1], [], []>} : vector<8x72xbf16>, vector<72x256xbf16>, vector<8x256xf32> -> vector<8x256xf32>
    %70 = arith.addf %1, %16 : vector<8x256xf32>
    %71 = arith.addf %70, %69 : vector<8x256xf32>
    %c0_33 = arith.constant 0 : index
    %c0_34 = arith.constant 0 : index
    %c0_35 = arith.constant 0 : index
    %72 = vector.load %arg8[%c0_33, %c0_34, %c0_35] : memref<1x8x256xf32, #tpu.memory_space<vmem>>, vector<1x8x256xf32>
    %73 = vector.shape_cast %72 : vector<1x8x256xf32> to vector<8x256xf32>
    %74 = vector.shape_cast %71 : vector<8x256xf32> to vector<1x8x256xf32>
    tpu.vector_store %arg8[%c0_33, %c0_34, %c0_35], %74 {strides = array<i32>} : memref<1x8x256xf32, #tpu.memory_space<vmem>>, vector<1x8x256xf32>,
    return
  }
  func.func @transform_0(%arg0: i32) -> (i32, i32, i32) {
    %c0_i32 = arith.constant 0 : i32
    %c0_i32_0 = arith.constant 0 : i32
    %c0_i32_1 = arith.constant 0 : i32
    return %arg0, %c0_i32, %c0_i32_0 : i32, i32, i32
  }
  func.func @transform_1(%arg0: i32) -> (i32, i32, i32) {
    %c0_i32 = arith.constant 0 : i32
    %c0_i32_0 = arith.constant 0 : i32
    %c0_i32_1 = arith.constant 0 : i32
    return %arg0, %c0_i32, %c0_i32_0 : i32, i32, i32
  }
  func.func @transform_2(%arg0: i32) -> (i32, i32) {
    %c0_i32 = arith.constant 0 : i32
    %c0_i32_0 = arith.constant 0 : i32
    %c0_i32_1 = arith.constant 0 : i32
    return %c0_i32, %c0_i32_0 : i32, i32
  }
  func.func @transform_3(%arg0: i32) -> (i32, i32) {
    %c0_i32 = arith.constant 0 : i32
    %c0_i32_0 = arith.constant 0 : i32
    %c0_i32_1 = arith.constant 0 : i32
    return %c0_i32, %c0_i32_0 : i32, i32
  }
  func.func @transform_4(%arg0: i32) -> (i32, i32) {
    %c0_i32 = arith.constant 0 : i32
    %c0_i32_0 = arith.constant 0 : i32
    %c0_i32_1 = arith.constant 0 : i32
    return %c0_i32, %c0_i32_0 : i32, i32
  }
  func.func @transform_5(%arg0: i32) -> (i32, i32) {
    %c0_i32 = arith.constant 0 : i32
    %c0_i32_0 = arith.constant 0 : i32
    %c0_i32_1 = arith.constant 0 : i32
    return %c0_i32, %c0_i32_0 : i32, i32
  }
  func.func @transform_6(%arg0: i32) -> (i32, i32) {
    %c0_i32 = arith.constant 0 : i32
    %c0_i32_0 = arith.constant 0 : i32
    %c0_i32_1 = arith.constant 0 : i32
    return %c0_i32, %c0_i32_0 : i32, i32
  }
  func.func @transform_7(%arg0: i32) -> (i32, i32, i32) {
    %c0_i32 = arith.constant 0 : i32
    %c0_i32_0 = arith.constant 0 : i32
    %c0_i32_1 = arith.constant 0 : i32
    return %arg0, %c0_i32, %c0_i32_0 : i32, i32, i32
  }
}

module attributes {stable_mosaic.version = 11 : i64} {
  func.func @kernel(%arg0: i32, %arg1: memref<1x8x256xf32, #tpu.memory_space<vmem>>, %arg2: memref<9x256xf32, #tpu.memory_space<vmem>>, %arg3: memref<8x4xf32, #tpu.memory_space<vmem>>, %arg4: memref<8x2xf32, #tpu.memory_space<vmem>>, %arg5: memref<8x72xbf16, #tpu.memory_space<vmem>>, %arg6: memref<1x8x256xbf16, #tpu.memory_space<vmem>>, %arg7: memref<8x2xf32, #tpu.memory_space<vmem>>, %arg8: memref<72x256xf32, #tpu.memory_space<vmem>>, %arg9: memref<8x1xf32, #tpu.memory_space<vmem>>, %arg10: memref<8x1xf32, #tpu.memory_space<vmem>>) attributes {dimension_semantics = [#tpu.dimension_semantics<arbitrary>], iteration_bounds = array<i64: 2>, scalar_prefetch = 0 : i64, scratch_operands = 3 : i64, tpu.core_type = #tpu.core_type<tc>, window_params = [{transform_indices = @transform_0, window_bounds = array<i64: 1, 8, 256>}, {pipeline_mode = #tpu.pipeline_mode<synchronous>, transform_indices = @transform_1, window_bounds = array<i64: 9, 256>}, {pipeline_mode = #tpu.pipeline_mode<synchronous>, transform_indices = @transform_2, window_bounds = array<i64: 8, 4>}, {pipeline_mode = #tpu.pipeline_mode<synchronous>, transform_indices = @transform_3, window_bounds = array<i64: 8, 2>}, {pipeline_mode = #tpu.pipeline_mode<synchronous>, transform_indices = @transform_4, window_bounds = array<i64: 8, 72>}, {transform_indices = @transform_5, window_bounds = array<i64: 1, 8, 256>}, {pipeline_mode = #tpu.pipeline_mode<synchronous>, transform_indices = @transform_6, window_bounds = array<i64: 8, 2>}]} {
    %c0_i32 = arith.constant 0 : i32
    %0 = arith.cmpi eq, %arg0, %c0_i32 : i32
    %1 = arith.extui %0 : i1 to i32
    %c0_i32_0 = arith.constant 0 : i32
    %2 = arith.cmpi ne, %1, %c0_i32_0 : i32
    scf.if %2 {
      %cst_37 = arith.constant 0.000000e+00 : f32
      %77 = vector.broadcast %cst_37 : f32 to vector<8x1xf32>
      %c0_38 = arith.constant 0 : index
      %c0_39 = arith.constant 0 : index
      %78 = vector.load %arg9[%c0_38, %c0_39] : memref<8x1xf32, #tpu.memory_space<vmem>>, vector<8x1xf32>
      tpu.vector_store %arg9[%c0_38, %c0_39], %77 {strides = array<i32>} : memref<8x1xf32, #tpu.memory_space<vmem>>, vector<8x1xf32>,
      %cst_40 = arith.constant 0.000000e+00 : f32
      %79 = vector.broadcast %cst_40 : f32 to vector<8x1xf32>
      %c0_41 = arith.constant 0 : index
      %c0_42 = arith.constant 0 : index
      %80 = vector.load %arg10[%c0_41, %c0_42] : memref<8x1xf32, #tpu.memory_space<vmem>>, vector<8x1xf32>
      tpu.vector_store %arg10[%c0_41, %c0_42], %79 {strides = array<i32>} : memref<8x1xf32, #tpu.memory_space<vmem>>, vector<8x1xf32>,
    } else {
    }
    %c0 = arith.constant 0 : index
    %c0_1 = arith.constant 0 : index
    %c0_2 = arith.constant 0 : index
    %3 = vector.load %arg1[%c0, %c0_1, %c0_2] : memref<1x8x256xf32, #tpu.memory_space<vmem>>, vector<1x8x256xf32>
    %4 = vector.shape_cast %3 : vector<1x8x256xf32> to vector<8x256xf32>
    %c0_3 = arith.constant 0 : index
    %c0_4 = arith.constant 0 : index
    %5 = vector.load %arg2[%c0_3, %c0_4] : memref<9x256xf32, #tpu.memory_space<vmem>>, vector<9x256xf32>
    %c0_5 = arith.constant 0 : index
    %c2 = arith.constant 2 : index
    %6 = vector.load %arg3[%c0_5, %c2] : memref<8x4xf32, #tpu.memory_space<vmem>>, vector<8x1xf32>
    %7 = vector.broadcast %6 : vector<8x1xf32> to vector<8x256xf32>
    %8 = arith.mulf %4, %7 : vector<8x256xf32>
    %c0_6 = arith.constant 0 : index
    %c3 = arith.constant 3 : index
    %9 = vector.load %arg3[%c0_6, %c3] : memref<8x4xf32, #tpu.memory_space<vmem>>, vector<8x1xf32>
    %10 = vector.broadcast %9 : vector<8x1xf32> to vector<8x256xf32>
    %11 = arith.addf %8, %10 : vector<8x256xf32>
    %cst = arith.constant 0.000000e+00 : f32
    %12 = vector.broadcast %cst : f32 to vector<8x256xf32>
    %13 = arith.maximumf %11, %12 : vector<8x256xf32>
    %c17_i32 = arith.constant 17 : i32
    %14 = tpu.dynamic_rotate %13 by %c17_i32 dim 1 : vector<8x256xf32>, i32 -> vector<8x256xf32>
    %15 = vector.extract_strided_slice %5 {offsets = [0, 0], sizes = [1, 256], strides = [1, 1]} : vector<9x256xf32> to vector<1x256xf32>
    %16 = vector.broadcast %15 : vector<1x256xf32> to vector<8x256xf32>
    %17 = arith.mulf %14, %16 : vector<8x256xf32>
    %c0_7 = arith.constant 0 : index
    %c0_8 = arith.constant 0 : index
    %18 = vector.load %arg8[%c0_7, %c0_8] : memref<72x256xf32, #tpu.memory_space<vmem>>, vector<8x256xf32>
    tpu.vector_store %arg8[%c0_7, %c0_8], %17 {strides = array<i32>} : memref<72x256xf32, #tpu.memory_space<vmem>>, vector<8x256xf32>,
    %c16_i32 = arith.constant 16 : i32
    %19 = tpu.dynamic_rotate %13 by %c16_i32 dim 1 : vector<8x256xf32>, i32 -> vector<8x256xf32>
    %20 = vector.extract_strided_slice %5 {offsets = [1, 0], sizes = [1, 256], strides = [1, 1]} : vector<9x256xf32> to vector<1x256xf32>
    %21 = vector.broadcast %20 : vector<1x256xf32> to vector<8x256xf32>
    %22 = arith.mulf %19, %21 : vector<8x256xf32>
    %c8 = arith.constant 8 : index
    %c0_9 = arith.constant 0 : index
    %23 = vector.load %arg8[%c8, %c0_9] : memref<72x256xf32, #tpu.memory_space<vmem>>, vector<8x256xf32>
    tpu.vector_store %arg8[%c8, %c0_9], %22 {strides = array<i32>} : memref<72x256xf32, #tpu.memory_space<vmem>>, vector<8x256xf32>,
    %c15_i32 = arith.constant 15 : i32
    %24 = tpu.dynamic_rotate %13 by %c15_i32 dim 1 : vector<8x256xf32>, i32 -> vector<8x256xf32>
    %25 = vector.extract_strided_slice %5 {offsets = [2, 0], sizes = [1, 256], strides = [1, 1]} : vector<9x256xf32> to vector<1x256xf32>
    %26 = vector.broadcast %25 : vector<1x256xf32> to vector<8x256xf32>
    %27 = arith.mulf %24, %26 : vector<8x256xf32>
    %c16 = arith.constant 16 : index
    %c0_10 = arith.constant 0 : index
    %28 = vector.load %arg8[%c16, %c0_10] : memref<72x256xf32, #tpu.memory_space<vmem>>, vector<8x256xf32>
    tpu.vector_store %arg8[%c16, %c0_10], %27 {strides = array<i32>} : memref<72x256xf32, #tpu.memory_space<vmem>>, vector<8x256xf32>,
    %c1_i32 = arith.constant 1 : i32
    %29 = tpu.dynamic_rotate %13 by %c1_i32 dim 1 : vector<8x256xf32>, i32 -> vector<8x256xf32>
    %30 = vector.extract_strided_slice %5 {offsets = [3, 0], sizes = [1, 256], strides = [1, 1]} : vector<9x256xf32> to vector<1x256xf32>
    %31 = vector.broadcast %30 : vector<1x256xf32> to vector<8x256xf32>
    %32 = arith.mulf %29, %31 : vector<8x256xf32>
    %c24 = arith.constant 24 : index
    %c0_11 = arith.constant 0 : index
    %33 = vector.load %arg8[%c24, %c0_11] : memref<72x256xf32, #tpu.memory_space<vmem>>, vector<8x256xf32>
    tpu.vector_store %arg8[%c24, %c0_11], %32 {strides = array<i32>} : memref<72x256xf32, #tpu.memory_space<vmem>>, vector<8x256xf32>,
    %c32 = arith.constant 32 : index
    %c0_12 = arith.constant 0 : index
    %34 = vector.load %arg8[%c32, %c0_12] : memref<72x256xf32, #tpu.memory_space<vmem>>, vector<8x256xf32>
    tpu.vector_store %arg8[%c32, %c0_12], %13 {strides = array<i32>} : memref<72x256xf32, #tpu.memory_space<vmem>>, vector<8x256xf32>,
    %c255_i32 = arith.constant 255 : i32
    %35 = tpu.dynamic_rotate %13 by %c255_i32 dim 1 : vector<8x256xf32>, i32 -> vector<8x256xf32>
    %36 = vector.extract_strided_slice %5 {offsets = [5, 0], sizes = [1, 256], strides = [1, 1]} : vector<9x256xf32> to vector<1x256xf32>
    %37 = vector.broadcast %36 : vector<1x256xf32> to vector<8x256xf32>
    %38 = arith.mulf %35, %37 : vector<8x256xf32>
    %c40 = arith.constant 40 : index
    %c0_13 = arith.constant 0 : index
    %39 = vector.load %arg8[%c40, %c0_13] : memref<72x256xf32, #tpu.memory_space<vmem>>, vector<8x256xf32>
    tpu.vector_store %arg8[%c40, %c0_13], %38 {strides = array<i32>} : memref<72x256xf32, #tpu.memory_space<vmem>>, vector<8x256xf32>,
    %c241_i32 = arith.constant 241 : i32
    %40 = tpu.dynamic_rotate %13 by %c241_i32 dim 1 : vector<8x256xf32>, i32 -> vector<8x256xf32>
    %41 = vector.extract_strided_slice %5 {offsets = [6, 0], sizes = [1, 256], strides = [1, 1]} : vector<9x256xf32> to vector<1x256xf32>
    %42 = vector.broadcast %41 : vector<1x256xf32> to vector<8x256xf32>
    %43 = arith.mulf %40, %42 : vector<8x256xf32>
    %c48 = arith.constant 48 : index
    %c0_14 = arith.constant 0 : index
    %44 = vector.load %arg8[%c48, %c0_14] : memref<72x256xf32, #tpu.memory_space<vmem>>, vector<8x256xf32>
    tpu.vector_store %arg8[%c48, %c0_14], %43 {strides = array<i32>} : memref<72x256xf32, #tpu.memory_space<vmem>>, vector<8x256xf32>,
    %c240_i32 = arith.constant 240 : i32
    %45 = tpu.dynamic_rotate %13 by %c240_i32 dim 1 : vector<8x256xf32>, i32 -> vector<8x256xf32>
    %46 = vector.extract_strided_slice %5 {offsets = [7, 0], sizes = [1, 256], strides = [1, 1]} : vector<9x256xf32> to vector<1x256xf32>
    %47 = vector.broadcast %46 : vector<1x256xf32> to vector<8x256xf32>
    %48 = arith.mulf %45, %47 : vector<8x256xf32>
    %c56 = arith.constant 56 : index
    %c0_15 = arith.constant 0 : index
    %49 = vector.load %arg8[%c56, %c0_15] : memref<72x256xf32, #tpu.memory_space<vmem>>, vector<8x256xf32>
    tpu.vector_store %arg8[%c56, %c0_15], %48 {strides = array<i32>} : memref<72x256xf32, #tpu.memory_space<vmem>>, vector<8x256xf32>,
    %c239_i32 = arith.constant 239 : i32
    %50 = tpu.dynamic_rotate %13 by %c239_i32 dim 1 : vector<8x256xf32>, i32 -> vector<8x256xf32>
    %51 = vector.extract_strided_slice %5 {offsets = [8, 0], sizes = [1, 256], strides = [1, 1]} : vector<9x256xf32> to vector<1x256xf32>
    %52 = vector.broadcast %51 : vector<1x256xf32> to vector<8x256xf32>
    %53 = arith.mulf %50, %52 : vector<8x256xf32>
    %c64 = arith.constant 64 : index
    %c0_16 = arith.constant 0 : index
    %54 = vector.load %arg8[%c64, %c0_16] : memref<72x256xf32, #tpu.memory_space<vmem>>, vector<8x256xf32>
    tpu.vector_store %arg8[%c64, %c0_16], %53 {strides = array<i32>} : memref<72x256xf32, #tpu.memory_space<vmem>>, vector<8x256xf32>,
    %c0_17 = arith.constant 0 : index
    %c0_18 = arith.constant 0 : index
    %55 = vector.load %arg5[%c0_17, %c0_18] : memref<8x72xbf16, #tpu.memory_space<vmem>>, vector<8x72xbf16>
    %c0_19 = arith.constant 0 : index
    %c0_20 = arith.constant 0 : index
    %56 = vector.load %arg8[%c0_19, %c0_20] : memref<72x256xf32, #tpu.memory_space<vmem>>, vector<72x256xf32>
    %57 = arith.truncf %56 : vector<72x256xf32> to vector<72x256xbf16>
    %cst_21 = arith.constant dense<0.000000e+00> : vector<8x256xf32>
    %58 = tpu.matmul %55, %57, %cst_21 {dimension_numbers = #tpu.dot_dimension_numbers<[1], [0], [0], [1], [0, 0, 1, 1], [], []>} : vector<8x72xbf16>, vector<72x256xbf16>, vector<8x256xf32> -> vector<8x256xf32>
    %59 = arith.truncf %58 : vector<8x256xf32> to vector<8x256xbf16>
    %c0_22 = arith.constant 0 : index
    %c0_23 = arith.constant 0 : index
    %c0_24 = arith.constant 0 : index
    %60 = vector.load %arg6[%c0_22, %c0_23, %c0_24] : memref<1x8x256xbf16, #tpu.memory_space<vmem>>, vector<1x8x256xbf16>
    %61 = vector.shape_cast %60 : vector<1x8x256xbf16> to vector<8x256xbf16>
    %62 = vector.shape_cast %59 : vector<8x256xbf16> to vector<1x8x256xbf16>
    tpu.vector_store %arg6[%c0_22, %c0_23, %c0_24], %62 {strides = array<i32>} : memref<1x8x256xbf16, #tpu.memory_space<vmem>>, vector<1x8x256xbf16>,
    %c0_25 = arith.constant 0 : index
    %c0_26 = arith.constant 0 : index
    %63 = vector.load %arg9[%c0_25, %c0_26] : memref<8x1xf32, #tpu.memory_space<vmem>>, vector<8x1xf32>
    %cst_27 = arith.constant dense<0.000000e+00> : vector<8xf32>
    %64 = vector.multi_reduction <add>, %58, %cst_27 [1] : vector<8x256xf32> to vector<8xf32>
    %65 = vector.shape_cast %64 : vector<8xf32> to vector<8x1xf32>
    %66 = arith.addf %63, %65 : vector<8x1xf32>
    %c0_28 = arith.constant 0 : index
    %c0_29 = arith.constant 0 : index
    %67 = vector.load %arg9[%c0_28, %c0_29] : memref<8x1xf32, #tpu.memory_space<vmem>>, vector<8x1xf32>
    tpu.vector_store %arg9[%c0_28, %c0_29], %66 {strides = array<i32>} : memref<8x1xf32, #tpu.memory_space<vmem>>, vector<8x1xf32>,
    %c0_30 = arith.constant 0 : index
    %c0_31 = arith.constant 0 : index
    %68 = vector.load %arg10[%c0_30, %c0_31] : memref<8x1xf32, #tpu.memory_space<vmem>>, vector<8x1xf32>
    %69 = arith.mulf %58, %58 : vector<8x256xf32>
    %cst_32 = arith.constant dense<0.000000e+00> : vector<8xf32>
    %70 = vector.multi_reduction <add>, %69, %cst_32 [1] : vector<8x256xf32> to vector<8xf32>
    %71 = vector.shape_cast %70 : vector<8xf32> to vector<8x1xf32>
    %72 = arith.addf %68, %71 : vector<8x1xf32>
    %c0_33 = arith.constant 0 : index
    %c0_34 = arith.constant 0 : index
    %73 = vector.load %arg10[%c0_33, %c0_34] : memref<8x1xf32, #tpu.memory_space<vmem>>, vector<8x1xf32>
    tpu.vector_store %arg10[%c0_33, %c0_34], %72 {strides = array<i32>} : memref<8x1xf32, #tpu.memory_space<vmem>>, vector<8x1xf32>,
    %c1_i32_35 = arith.constant 1 : i32
    %74 = arith.cmpi eq, %arg0, %c1_i32_35 : i32
    %75 = arith.extui %74 : i1 to i32
    %c0_i32_36 = arith.constant 0 : i32
    %76 = arith.cmpi ne, %75, %c0_i32_36 : i32
    scf.if %76 {
      %c0_37 = arith.constant 0 : index
      %c0_38 = arith.constant 0 : index
      %77 = vector.load %arg9[%c0_37, %c0_38] : memref<8x1xf32, #tpu.memory_space<vmem>>, vector<8x1xf32>
      %cst_39 = arith.constant 0.001953125 : f32
      %78 = vector.broadcast %cst_39 : f32 to vector<8x1xf32>
      %79 = arith.mulf %77, %78 : vector<8x1xf32>
      %c0_40 = arith.constant 0 : index
      %c0_41 = arith.constant 0 : index
      %80 = vector.load %arg10[%c0_40, %c0_41] : memref<8x1xf32, #tpu.memory_space<vmem>>, vector<8x1xf32>
      %cst_42 = arith.constant 0.001953125 : f32
      %81 = vector.broadcast %cst_42 : f32 to vector<8x1xf32>
      %82 = arith.mulf %80, %81 : vector<8x1xf32>
      %83 = arith.mulf %79, %79 : vector<8x1xf32>
      %84 = arith.subf %82, %83 : vector<8x1xf32>
      %cst_43 = arith.constant 9.99999974E-6 : f32
      %85 = vector.broadcast %cst_43 : f32 to vector<8x1xf32>
      %86 = arith.addf %84, %85 : vector<8x1xf32>
      %87 = math.rsqrt %86 : vector<8x1xf32>
      %c0_44 = arith.constant 0 : index
      %c0_45 = arith.constant 0 : index
      %88 = vector.load %arg4[%c0_44, %c0_45] : memref<8x2xf32, #tpu.memory_space<vmem>>, vector<8x1xf32>
      %89 = arith.mulf %88, %87 : vector<8x1xf32>
      %c0_46 = arith.constant 0 : index
      %c0_47 = arith.constant 0 : index
      %90 = vector.load %arg7[%c0_46, %c0_47] : memref<8x2xf32, #tpu.memory_space<vmem>>, vector<8x1xf32>
      tpu.vector_store %arg7[%c0_46, %c0_47], %89 {strides = array<i32>} : memref<8x2xf32, #tpu.memory_space<vmem>>, vector<8x1xf32>,
      %c0_48 = arith.constant 0 : index
      %c1 = arith.constant 1 : index
      %91 = vector.load %arg4[%c0_48, %c1] : memref<8x2xf32, #tpu.memory_space<vmem>>, vector<8x1xf32>
      %92 = arith.mulf %79, %89 : vector<8x1xf32>
      %93 = arith.subf %91, %92 : vector<8x1xf32>
      %c0_49 = arith.constant 0 : index
      %c1_50 = arith.constant 1 : index
      %94 = vector.load %arg7[%c0_49, %c1_50] : memref<8x2xf32, #tpu.memory_space<vmem>>, vector<8x1xf32>
      tpu.vector_store %arg7[%c0_49, %c1_50], %93 {strides = array<i32>} : memref<8x2xf32, #tpu.memory_space<vmem>>, vector<8x1xf32>,
    } else {
    }
    return
  }
  func.func @transform_0(%arg0: i32) -> (i32, i32, i32) {
    %c0_i32 = arith.constant 0 : i32
    %c0_i32_0 = arith.constant 0 : i32
    %c0_i32_1 = arith.constant 0 : i32
    return %arg0, %c0_i32, %c0_i32_0 : i32, i32, i32
  }
  func.func @transform_1(%arg0: i32) -> (i32, i32) {
    %c0_i32 = arith.constant 0 : i32
    %c0_i32_0 = arith.constant 0 : i32
    %c0_i32_1 = arith.constant 0 : i32
    return %c0_i32, %c0_i32_0 : i32, i32
  }
  func.func @transform_2(%arg0: i32) -> (i32, i32) {
    %c0_i32 = arith.constant 0 : i32
    %c0_i32_0 = arith.constant 0 : i32
    %c0_i32_1 = arith.constant 0 : i32
    return %c0_i32, %c0_i32_0 : i32, i32
  }
  func.func @transform_3(%arg0: i32) -> (i32, i32) {
    %c0_i32 = arith.constant 0 : i32
    %c0_i32_0 = arith.constant 0 : i32
    %c0_i32_1 = arith.constant 0 : i32
    return %c0_i32, %c0_i32_0 : i32, i32
  }
  func.func @transform_4(%arg0: i32) -> (i32, i32) {
    %c0_i32 = arith.constant 0 : i32
    %c0_i32_0 = arith.constant 0 : i32
    %c0_i32_1 = arith.constant 0 : i32
    return %c0_i32, %c0_i32_0 : i32, i32
  }
  func.func @transform_5(%arg0: i32) -> (i32, i32, i32) {
    %c0_i32 = arith.constant 0 : i32
    %c0_i32_0 = arith.constant 0 : i32
    %c0_i32_1 = arith.constant 0 : i32
    return %arg0, %c0_i32, %c0_i32_0 : i32, i32, i32
  }
  func.func @transform_6(%arg0: i32) -> (i32, i32) {
    %c0_i32 = arith.constant 0 : i32
    %c0_i32_0 = arith.constant 0 : i32
    %c0_i32_1 = arith.constant 0 : i32
    return %c0_i32, %c0_i32_0 : i32, i32
  }
}

</mosaic_0001>

<llo_original>
// kernel: four_conv_res_block.3
$region0: #{four_conv_res_block.3}
  #allocation0 [shape = 'u32[]', space=smem, size = 0x4, offset = 0x4, fixed_abs, tag = 'smem constant byte address 0x4 - core index']
  #allocation1 [shape = 'u32[144,128]{1,0:T(1,128)}', space=vmem, size = 0x12000, scoped, tag = 'internal scratch']
  #allocation2 [shape = 'f32[8,1]{1,0:T(8,128)}', space=vmem, size = 0x1000, scoped, tag = 'scratch operand']
  #allocation3 [shape = 'f32[8,1]{1,0:T(8,128)}', space=vmem, size = 0x1000, scoped, tag = 'scratch operand']
  %s0 = inlined_call_operand.vmem [shape: f32[2,8,256], index: 0, kind: input, shape index: {}]
  %s1 = inlined_call_operand.vmem [shape: f32[8,4], index: 1, kind: input, shape index: {}]
  %s2 = inlined_call_operand.vmem [shape: f32[8,4], index: 2, kind: output, shape index: {}]
  %s3 = sld [smem:[#allocation0]]
  $region49: #{four_conv_res_block.3} parent=0
    _
  %s5 = ssub.s32 1, %s3
  %s6 = scalar_select 0, %s5, %s3
  loop: start=0, step=1, limit=4
  $region2: #{four_conv_res_block.3} parent=0 // loop_pre_header
    _
  $region3: #{four_conv_res_block.3} parent=0 // loop_header
    %s8 = sphi 0, %s12
    %p9 = scmp.ge.s32.totalorder %s8, 4
    %s18 = sphi 0, %s20
    %s21 = sphi 0, %s18
    %s22 = sphi 0, %s21
    %s38 = sphi 0, %s22
    %s42 = sphi 0, %s42
    %s44 = sphi 0, %s42
    %s45 = sphi 0, %s44
    %s59 = sphi 0, %s45
    %s63 = sphi 0, %s63
    %s65 = sphi 0, %s63
    %s66 = sphi 0, %s65
    %s80 = sphi 0, %s66
  $region4: #{four_conv_res_block.3} parent=0 // loop_header_branch
    %11 = sbr.rel (%p9) target = $region8
  $region5: #{four_conv_res_block.3} parent=0 // loop_body
    %s13 = ssub.s32 %s8, 1
    %s14 = ssub.s32 %s8, 2
    %s15 = sadd.s32 %s8, 1
    %s16 = ssub.s32 %s8, %s15
    %p17 = scmp.eq.s32.totalorder %s16, 0
    %s19 = sadd.s32 %s18, 1
    %s20 = scalar_select %p17, %s18, %s19
    %p23 = pneg %p17
    %p24 = scmp.eq.s32.totalorder %s8, 1
    %p25 = por %p23, %p24
    %p26 = scmp.ne.s32.totalorder %s18, %s21
    %p27 = scmp.eq.s32.totalorder %s8, 0
    %p28 = por %p26, %p27
    %p29 = scmp.ne.s32.totalorder %s18, %s21
    %p30 = scmp.eq.s32.totalorder %s13, 1
    %p31 = por %p29, %p30
    %p32 = scmp.ne.s32.totalorder %s21, %s22
    %p33 = scmp.eq.s32.totalorder %s13, 0
    %p34 = por %p32, %p33
    %p35 = scmp.ne.s32.totalorder %s21, %s22
    %p36 = scmp.eq.s32.totalorder %s14, 1
    %p37 = por %p35, %p36
    %p39 = scmp.ne.s32.totalorder %s22, %s38
    %p40 = scmp.eq.s32.totalorder %s14, 0
    %p41 = por %p39, %p40
    %s43 = sadd.s32 %s42, 1
    %p46 = scmp.eq.s32.totalorder %s8, 1
    %p47 = scmp.ne.s32.totalorder %s42, %s44
    %p48 = scmp.eq.s32.totalorder %s8, 0
    %p49 = por %p47, %p48
    %p50 = scmp.ne.s32.totalorder %s42, %s44
    %p51 = scmp.eq.s32.totalorder %s13, 1
    %p52 = por %p50, %p51
    %p53 = scmp.ne.s32.totalorder %s44, %s45
    %p54 = scmp.eq.s32.totalorder %s13, 0
    %p55 = por %p53, %p54
    %p56 = scmp.ne.s32.totalorder %s44, %s45
    %p57 = scmp.eq.s32.totalorder %s14, 1
    %p58 = por %p56, %p57
    %p60 = scmp.ne.s32.totalorder %s45, %s59
    %p61 = scmp.eq.s32.totalorder %s14, 0
    %p62 = por %p60, %p61
    %s64 = sadd.s32 %s63, 1
    %p67 = scmp.eq.s32.totalorder %s8, 1
    %p68 = scmp.ne.s32.totalorder %s63, %s65
    %p69 = scmp.eq.s32.totalorder %s8, 0
    %p70 = por %p68, %p69
    %p71 = scmp.ne.s32.totalorder %s63, %s65
    %p72 = scmp.eq.s32.totalorder %s13, 1
    %p73 = por %p71, %p72
    %p74 = scmp.ne.s32.totalorder %s65, %s66
    %p75 = scmp.eq.s32.totalorder %s13, 0
    %p76 = por %p74, %p75
    %p77 = scmp.ne.s32.totalorder %s65, %s66
    %p78 = scmp.eq.s32.totalorder %s14, 1
    %p79 = por %p77, %p78
    %p81 = scmp.ne.s32.totalorder %s66, %s80
    %p82 = scmp.eq.s32.totalorder %s14, 0
    %p83 = por %p81, %p82
    %p84 = scmp.le.s32.totalorder 1, %s8
    %p85 = scmp.lt.s32.totalorder %s8, 3
    %p86 = pnand %p84, %p85
    %p87 = pneg %p86
    // Predicated region
    $region9: #{four_conv_res_block.3} parent=5 // pred_check
      _
    $region10: #{four_conv_res_block.3} parent=5 // pred_check_branch
      %89 = sbr.rel (%p86) target = $region12
    $region11: #{four_conv_res_block.3} parent=5 // pred_region
      %s90 = ssub.s32 %s8, 1
      // Predicated region
      $region13: #{four_conv_res_block.3} parent=11 // pred_check
        %p91 = pneg %p55
      $region14: #{four_conv_res_block.3} parent=11 // pred_check_branch
        %93 = sbr.rel (%p91) target = $region16
      $region15: #{four_conv_res_block.3} parent=11 // pred_region
        _
      $region16: #{four_conv_res_block.3} parent=11 // pred_fallthru
        _
    $region12: #{four_conv_res_block.3} parent=5 // pred_fallthru
      _
    %p94 = scmp.lt.s32.totalorder %s8, 2
    // Predicated region
    $region17: #{four_conv_res_block.3} parent=5 // pred_check
      %p95 = pneg %p94
    $region18: #{four_conv_res_block.3} parent=5 // pred_check_branch
      %97 = sbr.rel (%p95) target = $region20
    $region19: #{four_conv_res_block.3} parent=5 // pred_region
      // Predicated region
      $region21: #{four_conv_res_block.3} parent=19 // pred_check
        %p98 = pneg %p28
      $region22: #{four_conv_res_block.3} parent=19 // pred_check_branch
        %100 = sbr.rel (%p98) target = $region24
      $region23: #{four_conv_res_block.3} parent=19 // pred_region
        %p101 = scmp.lt.s32.totalorder %s8, 1
        %s102 = scalar_select %p101, %s8, 1
        %s103 = smul.addr %s102, 2
        %s104 = smul.addr %s103, 8
        %s105 = scalar_lea.vmem %s0, %s104
      $region24: #{four_conv_res_block.3} parent=19 // pred_fallthru
        _
    $region20: #{four_conv_res_block.3} parent=5 // pred_fallthru
      _
    %p106 = scmp.le.s32.totalorder 1, %s8
    %p107 = scmp.lt.s32.totalorder %s8, 3
    %p108 = pnand %p106, %p107
    %p109 = pneg %p108
    // Predicated region
    $region25: #{four_conv_res_block.3} parent=5 // pred_check
      _
    $region26: #{four_conv_res_block.3} parent=5 // pred_check_branch
      %111 = sbr.rel (%p108) target = $region28
    $region27: #{four_conv_res_block.3} parent=5 // pred_region
      %s112 = ssub.s32 %s8, 1
      %p113 = scmp.lt.s32.totalorder %s13, 1
      %s114 = scalar_select %p113, %s13, 1
      %s115 = smul.addr %s114, 2
      %s116 = smul.addr %s115, 8
      %s117 = scalar_lea.vmem %s0, %s116
      %p118 = pneg %p34
      %p119 = pneg %p31
      %p120 = pneg %p55
      %p121 = pneg %p52
      %p122 = pneg %p76
      %p123 = pneg %p73
      %p124 = scmp.lt.s32.totalorder %s13, 1
      %s125 = scalar_select %p124, %s13, 1
      %s126 = smul.addr %s125, 2
      %s127 = smul.addr %s126, 8
      %s128 = scalar_lea.vmem %s0, %s127
      %p129 = scmp.eq.s32.totalorder %s13, 0
      // Predicated region
      $region29: #{four_conv_res_block.3} parent=27 // pred_check
        %p130 = pneg %p129
      $region30: #{four_conv_res_block.3} parent=27 // pred_check_branch
        %132 = sbr.rel (%p130) target = $region32
      $region31: #{four_conv_res_block.3} parent=27 // pred_region
        %vm133 = vcmask 7168
        %134 = vst.msk [vmem:[#allocation2] sm:$0xff] %vm133, 0.0
        %135 = vst.msk [vmem:[#allocation3] sm:$0xff] %vm133, 0.0
      $region32: #{four_conv_res_block.3} parent=27 // pred_fallthru
        _
      %v136 = vld [vmem:[%s128] sm:$0xff]
      %v137 = vld [vmem:[%s128 + $0x8] sm:$0xff]
      %v138 = vld [vmem:[#allocation2] sm:$0xff]
      %v139 = vadd.f32 %v136, %v137
      %140 = vadd.xlane.f32.xlu0 %v139
      %v141 = vpop.xlane.xlu0 %140
      %v142 = vadd.f32 %v138, %v141
      %vm143 = vcmask 7168
      %144 = vst.msk [vmem:[#allocation2] sm:$0xff] %vm143, %v142
      %v145 = vld [vmem:[#allocation3] sm:$0xff]
      %v146 = vmul.f32 %v136, %v136
      %v147 = vmul.f32 %v137, %v137
      %v148 = vadd.f32 %v146, %v147
      %149 = vadd.xlane.f32.xlu0 %v148
      %v150 = vpop.xlane.xlu0 %149
      %v151 = vadd.f32 %v145, %v150
      %152 = vst.msk [vmem:[#allocation3] sm:$0xff] %vm143, %v151
      %p153 = scmp.eq.s32.totalorder %s13, 1
      // Predicated region
      $region33: #{four_conv_res_block.3} parent=27 // pred_check
        %p154 = pneg %p153
      $region34: #{four_conv_res_block.3} parent=27 // pred_check_branch
        %156 = sbr.rel (%p154) target = $region36
      $region35: #{four_conv_res_block.3} parent=27 // pred_region
        %v157 = vld [vmem:[#allocation2] sm:$0xff]
        %v158 = vmul.f32 %v157, 0.001953125
        %v159 = vld [vmem:[#allocation3] sm:$0xff]
        %v160 = vmul.f32 %v159, 0.001953125
        %v161 = vmul.f32 %v158, %v158
        %v162 = vsub.f32 %v160, %v161
        %v163 = vadd.f32 %v162, 1e-05
        %v164 = vrsqrt.pop %v163
        %v165 = vld [vmem:[%s1] sm:$0xff]
        %v166 = vmul.f32 %v165, %v164
        %167 = vst.msk [vmem:[%s2] sm:$0xff] %vm143, %v166
        %v168 = vmul.f32 %v158, %v166
        %170 = vrot.lane.b32.xlu0 %v168, 1
        %v171 = vpop.permute.xlu0 %170
        %v173 = vsub.f32 %v165, %v171
        %vm174 = vcmask 15368
        %175 = vst.msk [vmem:[%s2] sm:$0xff] %vm174, %v173
        %v176 = vld [vmem:[%s1] sm:$0xff]
        %178 = vrot.lane.b32.xlu0 %v164, 2
        %v179 = vpop.permute.xlu0 %178
        %v181 = vmul.f32 %v176, %v179
        %vm182 = vcmask 23568
        %183 = vst.msk [vmem:[%s2] sm:$0xff] %vm182, %v181
        %185 = vrot.lane.b32.xlu0 %v181, 126
        %v186 = vpop.permute.xlu0 %185
        %v188 = vmul.f32 %v158, %v186
        %190 = vrot.lane.b32.xlu0 %v188, 3
        %v191 = vpop.permute.xlu0 %190
        %v193 = vsub.f32 %v176, %v191
        %vm194 = vcmask 31768
        %195 = vst.msk [vmem:[%s2] sm:$0xff] %vm194, %v193
      $region36: #{four_conv_res_block.3} parent=27 // pred_fallthru
        _
      // Predicated region
      $region37: #{four_conv_res_block.3} parent=27 // pred_check
        %p196 = pneg %p73
      $region38: #{four_conv_res_block.3} parent=27 // pred_check_branch
        %198 = sbr.rel (%p196) target = $region40
      $region39: #{four_conv_res_block.3} parent=27 // pred_region
        _
      $region40: #{four_conv_res_block.3} parent=27 // pred_fallthru
        _
      // Predicated region
      $region41: #{four_conv_res_block.3} parent=27 // pred_check
        %p199 = pneg %p73
      $region42: #{four_conv_res_block.3} parent=27 // pred_check_branch
        %201 = sbr.rel (%p199) target = $region44
      $region43: #{four_conv_res_block.3} parent=27 // pred_region
        _
      $region44: #{four_conv_res_block.3} parent=27 // pred_fallthru
        _
    $region28: #{four_conv_res_block.3} parent=5 // pred_fallthru
      _
    %p202 = scmp.le.s32.totalorder 2, %s8
    // Predicated region
    $region45: #{four_conv_res_block.3} parent=5 // pred_check
      %p203 = pneg %p202
    $region46: #{four_conv_res_block.3} parent=5 // pred_check_branch
      %205 = sbr.rel (%p203) target = $region48
    $region47: #{four_conv_res_block.3} parent=5 // pred_region
      %s206 = ssub.s32 %s8, 2
    $region48: #{four_conv_res_block.3} parent=5 // pred_fallthru
      _
  $region6: #{four_conv_res_block.3} parent=0 // loop_footer
    %s12 = sadd.s32 1, %s8
  $region7: #{four_conv_res_block.3} parent=0 // loop_footer_branch
    %7 = sbr.rel target = $region3
  $region8: #{four_conv_res_block.3} parent=0 // loop_exit
    _

// kernel: four_conv_res_block.5
$region0: #{four_conv_res_block.5}
  #allocation0 [shape = 'u32[]', space=smem, size = 0x4, offset = 0x4, fixed_abs, tag = 'smem constant byte address 0x4 - core index']
  #allocation1 [shape = 'u32[144,128]{1,0:T(1,128)}', space=vmem, size = 0x12000, scoped, tag = 'internal scratch']
  #allocation2 [shape = 'f32[72,256]{1,0:T(8,128)}', space=vmem, size = 0x12000, scoped, tag = 'scratch operand']
  %s0 = inlined_call_operand.vmem [shape: f32[2,8,256], index: 0, kind: input, shape index: {}]
  %s1 = inlined_call_operand.vmem [shape: bf16[2,8,256], index: 1, kind: input, shape index: {}]
  %s2 = inlined_call_operand.vmem [shape: f32[9,256], index: 2, kind: input, shape index: {}]
  %s3 = inlined_call_operand.vmem [shape: f32[8,4], index: 3, kind: input, shape index: {}]
  %s4 = inlined_call_operand.vmem [shape: f32[8,2], index: 4, kind: input, shape index: {}]
  %s5 = inlined_call_operand.vmem [shape: bf16[8,8], index: 5, kind: input, shape index: {}]
  %s6 = inlined_call_operand.vmem [shape: bf16[8,72], index: 6, kind: input, shape index: {}]
  %s7 = inlined_call_operand.vmem [shape: f32[2,8,256], index: 7, kind: output, shape index: {}]
  %s8 = sld [smem:[#allocation0]]
  $region61: #{four_conv_res_block.5} parent=0
    _
  %s10 = ssub.s32 1, %s8
  %s11 = scalar_select 0, %s10, %s8
  loop: start=0, step=1, limit=4
  $region2: #{four_conv_res_block.5} parent=0 // loop_pre_header
    _
  $region3: #{four_conv_res_block.5} parent=0 // loop_header
    %s13 = sphi 0, %s17
    %p14 = scmp.ge.s32.totalorder %s13, 4
    %s23 = sphi 0, %s25
    %s26 = sphi 0, %s23
    %s27 = sphi 0, %s26
    %s43 = sphi 0, %s27
    %s49 = sphi 0, %s51
    %s52 = sphi 0, %s49
    %s53 = sphi 0, %s52
    %s69 = sphi 0, %s53
    %s73 = sphi 0, %s73
    %s75 = sphi 0, %s73
    %s76 = sphi 0, %s75
    %s90 = sphi 0, %s76
    %s94 = sphi 0, %s94
    %s96 = sphi 0, %s94
    %s97 = sphi 0, %s96
    %s111 = sphi 0, %s97
    %s115 = sphi 0, %s115
    %s117 = sphi 0, %s115
    %s118 = sphi 0, %s117
    %s132 = sphi 0, %s118
    %s136 = sphi 0, %s136
    %s138 = sphi 0, %s136
    %s139 = sphi 0, %s138
    %s153 = sphi 0, %s139
    %s157 = sphi 0, %s157
    %s159 = sphi 0, %s157
    %s160 = sphi 0, %s159
    %s174 = sphi 0, %s160
    %s180 = sphi 0, %s182
    %s183 = sphi 0, %s180
    %s184 = sphi 0, %s183
    %s200 = sphi 0, %s184
  $region4: #{four_conv_res_block.5} parent=0 // loop_header_branch
    %16 = sbr.rel (%p14) target = $region8
  $region5: #{four_conv_res_block.5} parent=0 // loop_body
    %s18 = ssub.s32 %s13, 1
    %s19 = ssub.s32 %s13, 2
    %s20 = sadd.s32 %s13, 1
    %s21 = ssub.s32 %s13, %s20
    %p22 = scmp.eq.s32.totalorder %s21, 0
    %s24 = sadd.s32 %s23, 1
    %s25 = scalar_select %p22, %s23, %s24
    %p28 = pneg %p22
    %p29 = scmp.eq.s32.totalorder %s13, 1
    %p30 = por %p28, %p29
    %p31 = scmp.ne.s32.totalorder %s23, %s26
    %p32 = scmp.eq.s32.totalorder %s13, 0
    %p33 = por %p31, %p32
    %p34 = scmp.ne.s32.totalorder %s23, %s26
    %p35 = scmp.eq.s32.totalorder %s18, 1
    %p36 = por %p34, %p35
    %p37 = scmp.ne.s32.totalorder %s26, %s27
    %p38 = scmp.eq.s32.totalorder %s18, 0
    %p39 = por %p37, %p38
    %p40 = scmp.ne.s32.totalorder %s26, %s27
    %p41 = scmp.eq.s32.totalorder %s19, 1
    %p42 = por %p40, %p41
    %p44 = scmp.ne.s32.totalorder %s27, %s43
    %p45 = scmp.eq.s32.totalorder %s19, 0
    %p46 = por %p44, %p45
    %s47 = ssub.s32 %s13, %s20
    %p48 = scmp.eq.s32.totalorder %s47, 0
    %s50 = sadd.s32 %s49, 1
    %s51 = scalar_select %p48, %s49, %s50
    %p54 = pneg %p48
    %p55 = scmp.eq.s32.totalorder %s13, 1
    %p56 = por %p54, %p55
    %p57 = scmp.ne.s32.totalorder %s49, %s52
    %p58 = scmp.eq.s32.totalorder %s13, 0
    %p59 = por %p57, %p58
    %p60 = scmp.ne.s32.totalorder %s49, %s52
    %p61 = scmp.eq.s32.totalorder %s18, 1
    %p62 = por %p60, %p61
    %p63 = scmp.ne.s32.totalorder %s52, %s53
    %p64 = scmp.eq.s32.totalorder %s18, 0
    %p65 = por %p63, %p64
    %p66 = scmp.ne.s32.totalorder %s52, %s53
    %p67 = scmp.eq.s32.totalorder %s19, 1
    %p68 = por %p66, %p67
    %p70 = scmp.ne.s32.totalorder %s53, %s69
    %p71 = scmp.eq.s32.totalorder %s19, 0
    %p72 = por %p70, %p71
    %s74 = sadd.s32 %s73, 1
    %p77 = scmp.eq.s32.totalorder %s13, 1
    %p78 = scmp.ne.s32.totalorder %s73, %s75
    %p79 = scmp.eq.s32.totalorder %s13, 0
    %p80 = por %p78, %p79
    %p81 = scmp.ne.s32.totalorder %s73, %s75
    %p82 = scmp.eq.s32.totalorder %s18, 1
    %p83 = por %p81, %p82
    %p84 = scmp.ne.s32.totalorder %s75, %s76
    %p85 = scmp.eq.s32.totalorder %s18, 0
    %p86 = por %p84, %p85
    %p87 = scmp.ne.s32.totalorder %s75, %s76
    %p88 = scmp.eq.s32.totalorder %s19, 1
    %p89 = por %p87, %p88
    %p91 = scmp.ne.s32.totalorder %s76, %s90
    %p92 = scmp.eq.s32.totalorder %s19, 0
    %p93 = por %p91, %p92
    %s95 = sadd.s32 %s94, 1
    %p98 = scmp.eq.s32.totalorder %s13, 1
    %p99 = scmp.ne.s32.totalorder %s94, %s96
    %p100 = scmp.eq.s32.totalorder %s13, 0
    %p101 = por %p99, %p100
    %p102 = scmp.ne.s32.totalorder %s94, %s96
    %p103 = scmp.eq.s32.totalorder %s18, 1
    %p104 = por %p102, %p103
    %p105 = scmp.ne.s32.totalorder %s96, %s97
    %p106 = scmp.eq.s32.totalorder %s18, 0
    %p107 = por %p105, %p106
    %p108 = scmp.ne.s32.totalorder %s96, %s97
    %p109 = scmp.eq.s32.totalorder %s19, 1
    %p110 = por %p108, %p109
    %p112 = scmp.ne.s32.totalorder %s97, %s111
    %p113 = scmp.eq.s32.totalorder %s19, 0
    %p114 = por %p112, %p113
    %s116 = sadd.s32 %s115, 1
    %p119 = scmp.eq.s32.totalorder %s13, 1
    %p120 = scmp.ne.s32.totalorder %s115, %s117
    %p121 = scmp.eq.s32.totalorder %s13, 0
    %p122 = por %p120, %p121
    %p123 = scmp.ne.s32.totalorder %s115, %s117
    %p124 = scmp.eq.s32.totalorder %s18, 1
    %p125 = por %p123, %p124
    %p126 = scmp.ne.s32.totalorder %s117, %s118
    %p127 = scmp.eq.s32.totalorder %s18, 0
    %p128 = por %p126, %p127
    %p129 = scmp.ne.s32.totalorder %s117, %s118
    %p130 = scmp.eq.s32.totalorder %s19, 1
    %p131 = por %p129, %p130
    %p133 = scmp.ne.s32.totalorder %s118, %s132
    %p134 = scmp.eq.s32.totalorder %s19, 0
    %p135 = por %p133, %p134
    %s137 = sadd.s32 %s136, 1
    %p140 = scmp.eq.s32.totalorder %s13, 1
    %p141 = scmp.ne.s32.totalorder %s136, %s138
    %p142 = scmp.eq.s32.totalorder %s13, 0
    %p143 = por %p141, %p142
    %p144 = scmp.ne.s32.totalorder %s136, %s138
    %p145 = scmp.eq.s32.totalorder %s18, 1
    %p146 = por %p144, %p145
    %p147 = scmp.ne.s32.totalorder %s138, %s139
    %p148 = scmp.eq.s32.totalorder %s18, 0
    %p149 = por %p147, %p148
    %p150 = scmp.ne.s32.totalorder %s138, %s139
    %p151 = scmp.eq.s32.totalorder %s19, 1
    %p152 = por %p150, %p151
    %p154 = scmp.ne.s32.totalorder %s139, %s153
    %p155 = scmp.eq.s32.totalorder %s19, 0
    %p156 = por %p154, %p155
    %s158 = sadd.s32 %s157, 1
    %p161 = scmp.eq.s32.totalorder %s13, 1
    %p162 = scmp.ne.s32.totalorder %s157, %s159
    %p163 = scmp.eq.s32.totalorder %s13, 0
    %p164 = por %p162, %p163
    %p165 = scmp.ne.s32.totalorder %s157, %s159
    %p166 = scmp.eq.s32.totalorder %s18, 1
    %p167 = por %p165, %p166
    %p168 = scmp.ne.s32.totalorder %s159, %s160
    %p169 = scmp.eq.s32.totalorder %s18, 0
    %p170 = por %p168, %p169
    %p171 = scmp.ne.s32.totalorder %s159, %s160
    %p172 = scmp.eq.s32.totalorder %s19, 1
    %p173 = por %p171, %p172
    %p175 = scmp.ne.s32.totalorder %s160, %s174
    %p176 = scmp.eq.s32.totalorder %s19, 0
    %p177 = por %p175, %p176
    %s178 = ssub.s32 %s13, %s20
    %p179 = scmp.eq.s32.totalorder %s178, 0
    %s181 = sadd.s32 %s180, 1
    %s182 = scalar_select %p179, %s180, %s181
    %p185 = pneg %p179
    %p186 = scmp.eq.s32.totalorder %s13, 1
    %p187 = por %p185, %p186
    %p188 = scmp.ne.s32.totalorder %s180, %s183
    %p189 = scmp.eq.s32.totalorder %s13, 0
    %p190 = por %p188, %p189
    %p191 = scmp.ne.s32.totalorder %s180, %s183
    %p192 = scmp.eq.s32.totalorder %s18, 1
    %p193 = por %p191, %p192
    %p194 = scmp.ne.s32.totalorder %s183, %s184
    %p195 = scmp.eq.s32.totalorder %s18, 0
    %p196 = por %p194, %p195
    %p197 = scmp.ne.s32.totalorder %s183, %s184
    %p198 = scmp.eq.s32.totalorder %s19, 1
    %p199 = por %p197, %p198
    %p201 = scmp.ne.s32.totalorder %s184, %s200
    %p202 = scmp.eq.s32.totalorder %s19, 0
    %p203 = por %p201, %p202
    %p204 = scmp.le.s32.totalorder 1, %s13
    %p205 = scmp.lt.s32.totalorder %s13, 3
    %p206 = pnand %p204, %p205
    %p207 = pneg %p206
    // Predicated region
    $region9: #{four_conv_res_block.5} parent=5 // pred_check
      _
    $region10: #{four_conv_res_block.5} parent=5 // pred_check_branch
      %209 = sbr.rel (%p206) target = $region12
    $region11: #{four_conv_res_block.5} parent=5 // pred_region
      %s210 = ssub.s32 %s13, 1
      // Predicated region
      $region13: #{four_conv_res_block.5} parent=11 // pred_check
        %p211 = pneg %p86
      $region14: #{four_conv_res_block.5} parent=11 // pred_check_branch
        %213 = sbr.rel (%p211) target = $region16
      $region15: #{four_conv_res_block.5} parent=11 // pred_region
        _
      $region16: #{four_conv_res_block.5} parent=11 // pred_fallthru
        _
      // Predicated region
      $region17: #{four_conv_res_block.5} parent=11 // pred_check
        %p214 = pneg %p107
      $region18: #{four_conv_res_block.5} parent=11 // pred_check_branch
        %216 = sbr.rel (%p214) target = $region20
      $region19: #{four_conv_res_block.5} parent=11 // pred_region
        _
      $region20: #{four_conv_res_block.5} parent=11 // pred_fallthru
        _
      // Predicated region
      $region21: #{four_conv_res_block.5} parent=11 // pred_check
        %p217 = pneg %p128
      $region22: #{four_conv_res_block.5} parent=11 // pred_check_branch
        %219 = sbr.rel (%p217) target = $region24
      $region23: #{four_conv_res_block.5} parent=11 // pred_region
        _
      $region24: #{four_conv_res_block.5} parent=11 // pred_fallthru
        _
      // Predicated region
      $region25: #{four_conv_res_block.5} parent=11 // pred_check
        %p220 = pneg %p149
      $region26: #{four_conv_res_block.5} parent=11 // pred_check_branch
        %222 = sbr.rel (%p220) target = $region28
      $region27: #{four_conv_res_block.5} parent=11 // pred_region
        _
      $region28: #{four_conv_res_block.5} parent=11 // pred_fallthru
        _
      // Predicated region
      $region29: #{four_conv_res_block.5} parent=11 // pred_check
        %p223 = pneg %p170
      $region30: #{four_conv_res_block.5} parent=11 // pred_check_branch
        %225 = sbr.rel (%p223) target = $region32
      $region31: #{four_conv_res_block.5} parent=11 // pred_region
        _
      $region32: #{four_conv_res_block.5} parent=11 // pred_fallthru
        _
    $region12: #{four_conv_res_block.5} parent=5 // pred_fallthru
      _
    %p226 = scmp.lt.s32.totalorder %s13, 2
    // Predicated region
    $region33: #{four_conv_res_block.5} parent=5 // pred_check
      %p227 = pneg %p226
    $region34: #{four_conv_res_block.5} parent=5 // pred_check_branch
      %229 = sbr.rel (%p227) target = $region36
    $region35: #{four_conv_res_block.5} parent=5 // pred_region
      // Predicated region
      $region37: #{four_conv_res_block.5} parent=35 // pred_check
        %p230 = pneg %p33
      $region38: #{four_conv_res_block.5} parent=35 // pred_check_branch
        %232 = sbr.rel (%p230) target = $region40
      $region39: #{four_conv_res_block.5} parent=35 // pred_region
        %p233 = scmp.lt.s32.totalorder %s13, 1
        %s234 = scalar_select %p233, %s13, 1
        %s235 = smul.addr %s234, 2
        %s236 = smul.addr %s235, 8
        %s237 = scalar_lea.vmem %s0, %s236
      $region40: #{four_conv_res_block.5} parent=35 // pred_fallthru
        _
      // Predicated region
      $region41: #{four_conv_res_block.5} parent=35 // pred_check
        %p238 = pneg %p59
      $region42: #{four_conv_res_block.5} parent=35 // pred_check_branch
        %240 = sbr.rel (%p238) target = $region44
      $region43: #{four_conv_res_block.5} parent=35 // pred_region
        %p241 = scmp.lt.s32.totalorder %s13, 1
        %s242 = scalar_select %p241, %s13, 1
        %s243 = smul.addr %s242, 2
        %s244 = smul.addr %s243, 4
        %s245 = scalar_lea.vmem %s1, %s244
      $region44: #{four_conv_res_block.5} parent=35 // pred_fallthru
        _
    $region36: #{four_conv_res_block.5} parent=5 // pred_fallthru
      _
    %p246 = scmp.le.s32.totalorder 1, %s13
    %p247 = scmp.lt.s32.totalorder %s13, 3
    %p248 = pnand %p246, %p247
    %p249 = pneg %p248
    // Predicated region
    $region45: #{four_conv_res_block.5} parent=5 // pred_check
      _
    $region46: #{four_conv_res_block.5} parent=5 // pred_check_branch
      %251 = sbr.rel (%p248) target = $region48
    $region47: #{four_conv_res_block.5} parent=5 // pred_region
      %s252 = ssub.s32 %s13, 1
      %p253 = scmp.lt.s32.totalorder %s18, 1
      %s254 = scalar_select %p253, %s18, 1
      %s255 = smul.addr %s254, 2
      %s256 = smul.addr %s255, 8
      %s257 = scalar_lea.vmem %s0, %s256
      %p258 = pneg %p39
      %p259 = pneg %p36
      %p260 = scmp.lt.s32.totalorder %s18, 1
      %s261 = scalar_select %p260, %s18, 1
      %s262 = smul.addr %s261, 2
      %s263 = smul.addr %s262, 4
      %s264 = scalar_lea.vmem %s1, %s263
      %p265 = pneg %p65
      %p266 = pneg %p62
      %p267 = pneg %p86
      %p268 = pneg %p83
      %p269 = pneg %p107
      %p270 = pneg %p104
      %p271 = pneg %p128
      %p272 = pneg %p125
      %p273 = pneg %p149
      %p274 = pneg %p146
      %p275 = pneg %p170
      %p276 = pneg %p167
      %p277 = pneg %p196
      %p278 = pneg %p193
      %p279 = scmp.lt.s32.totalorder %s18, 1
      %s280 = scalar_select %p279, %s18, 1
      %s281 = smul.addr %s280, 2
      %s282 = smul.addr %s281, 8
      %s283 = scalar_lea.vmem %s7, %s282
      %p284 = scmp.lt.s32.totalorder %s18, 1
      %s285 = scalar_select %p284, %s18, 1
      %s286 = smul.addr %s285, 2
      %s287 = smul.addr %s286, 8
      %s288 = scalar_lea.vmem %s0, %s287
      %p289 = scmp.lt.s32.totalorder %s18, 1
      %s290 = scalar_select %p289, %s18, 1
      %s291 = smul.addr %s290, 2
      %s292 = smul.addr %s291, 4
      %s293 = scalar_lea.vmem %s1, %s292
      %p294 = scmp.lt.s32.totalorder %s18, 1
      %s295 = scalar_select %p294, %s18, 1
      %s296 = smul.addr %s295, 2
      %s297 = smul.addr %s296, 8
      %s298 = scalar_lea.vmem %s7, %s297
      %v300 = vld [vmem:[%s288] sm:$0xff]
      %v301 = vld [vmem:[%s288 + $0x8] sm:$0xff]
      %v302 = vld [vmem:[%s293] sm:$0xff]
      %v303 = vunpack.c.l.bf16 %v302
      %v304 = vunpack.c.h.bf16 %v302
      %v305 = vld [vmem:[%s2] sm:$0xff]
      %v306 = vld [vmem:[%s2 + $0x8] sm:$0xff]
      %v307 = vld [vmem:[%s2 + $0x10] sm:$0x1]
      %v308 = vld [vmem:[%s2 + $0x18] sm:$0x1]
      %v309 = vld [vmem:[%s3] sm:$0xff]
      %311 = vset.pattern.permute.xlu0 0
      %312 = vperm.xlu0 %311, %v309
      %v313 = vpop.permute.xlu0 %312
      %v315 = vmul.f32 %v300, %v313
      %v316 = vmul.f32 %v301, %v313
      %317 = vset.pattern.permute.xlu0 1
      %318 = vperm.xlu0 %317, %v309
      %v319 = vpop.permute.xlu0 %318
      %v321 = vadd.f32 %v315, %v319
      %v322 = vadd.f32 %v316, %v319
      %v323 = vmax.f32 %v321, 0.0
      %v324 = vmax.f32 %v322, 0.0
      %v325 = vld [vmem:[%s5] sm:$0xf]
      %v326 = vpack.c.bf16 %v323, %v323
      %v327 = vpack.c.bf16 %v324, %v324
      %vm328 = vcmask 64512
      %v330 = vsel %vm328, %v325, 0
      %vm332 = vcmask 1043456
      %v334 = vsel %vm332, %v326, 0
      %v337 = vsel %vm332, %v327, 0
      %339 = vmatprep.subr.bf16.mxu0 0
      %340 = vmatpush1.bf16.msra.mxu0 0
      %341 = vmatprep.subr.bf16.mxu0 0
      %342 = vmatpush1.bf16.msra.mxu0 0
      %343 = vmatprep.subr.bf16.mxu0 0
      %344 = vmatpush1.bf16.msra.mxu0 0
      %345 = vmatprep.subr.bf16.mxu0 0
      %346 = vmatpush1.bf16.msra.mxu0 0
      %347 = vmatprep.subr.bf16.mxu0 0
      %348 = vmatpush1.bf16.msra.mxu0 0
      %349 = vmatprep.subr.bf16.mxu0 0
      %350 = vmatpush1.bf16.msra.mxu0 0
      %351 = vmatprep.subr.bf16.mxu0 0
      %352 = vmatpush1.bf16.msra.mxu0 0
      %353 = vmatprep.subr.bf16.mxu0 %v337
      %354 = vmatpush1.bf16.msra.mxu0 %v334
      %355 = vmatprep.subr.bf16.mxu0 0
      %356 = vmatpush2.bf16.msra.mxu0 0
      %357 = vmatprep.subr.bf16.mxu0 0
      %358 = vmatpush2.bf16.msra.mxu0 0
      %359 = vmatprep.subr.bf16.mxu0 0
      %360 = vmatpush2.bf16.msra.mxu0 0
      %361 = vmatprep.subr.bf16.mxu0 0
      %362 = vmatpush2.bf16.msra.mxu0 0
      %363 = vmatprep.subr.bf16.mxu0 0
      %364 = vmatpush2.bf16.msra.mxu0 0
      %365 = vmatprep.subr.bf16.mxu0 0
      %366 = vmatpush2.bf16.msra.mxu0 0
      %367 = vmatprep.subr.bf16.mxu0 0
      %368 = vmatpush2.bf16.msra.mxu0 0
      %369 = vmatprep.subr.bf16.mxu0 0
      %370 = vmatpush2.bf16.msra.mxu0 0
      %371 = vmatprep.mubr.bf16.mxu0 0
      %372 = vmatmul.mubr.bf16.gmra.mxu0 %v330
      %v373 = vpop.f32.mrf.mxu0
      %v374 = vadd.f32 0.0, %v373
      %v375 = vpop.f32.mrf.mxu0
      %v376 = vadd.f32 0.0, %v375
      %v377 = vpop.f32.mrf.mxu0
      %v378 = vpop.f32.mrf.mxu0
      %379 = vdwg.mxu0
      %v380 = vld [vmem:[%s4] sm:$0xff]
      %382 = vset.pattern.permute.xlu0 0
      %383 = vperm.xlu0 %382, %v380
      %v384 = vpop.permute.xlu0 %383
      %v386 = vmul.f32 %v303, %v384
      %v387 = vmul.f32 %v304, %v384
      %388 = vset.pattern.permute.xlu0 1
      %389 = vperm.xlu0 %388, %v380
      %v390 = vpop.permute.xlu0 %389
      %v392 = vadd.f32 %v386, %v390
      %v393 = vadd.f32 %v387, %v390
      %v394 = vmax.f32 %v392, 0.0
      %v395 = vmax.f32 %v393, 0.0
      %396 = vrot.lane.b32.xlu0 %v394, 17
      %v397 = vpop.permute.xlu0 %396
      %398 = vrot.lane.b32.xlu0 %v395, 17
      %v399 = vpop.permute.xlu0 %398
      %v400 = vlaneseq
      %v401 = vand.u32 %v400, 127
      %vm402 = vcmp.lt.s32.totalorder %v401, 17
      %v403 = vsel %vm402, %v397, %v399
      %v404 = vsel %vm402, %v399, %v397
      %v405 = vlaneseq
      %v406 = vshrl.u32 %v405, 7
      %v407 = vsub.s32 0, %v406
      %v408 = vrot.slane %v305, %v407
      %v409 = vlaneseq
      %v410 = vshrl.u32 %v409, 7
      %v411 = vsub.s32 0, %v410
      %v412 = vrot.slane %v306, %v411
      %v413 = vmul.f32 %v404, %v408
      %v414 = vmul.f32 %v403, %v412
      %415 = vst [vmem:[#allocation2] sm:$0xff] %v413
      %416 = vst [vmem:[#allocation2 + $0x8] sm:$0xff] %v414
      %417 = vrot.lane.b32.xlu0 %v394, 16
      %v418 = vpop.permute.xlu0 %417
      %419 = vrot.lane.b32.xlu0 %v395, 16
      %v420 = vpop.permute.xlu0 %419
      %vm421 = vcmp.lt.s32.totalorder %v401, 16
      %v422 = vsel %vm421, %v418, %v420
      %v423 = vsel %vm421, %v420, %v418
      %v424 = vlaneseq
      %v425 = vshrl.u32 %v424, 7
      %v426 = vsub.s32 1, %v425
      %v427 = vrot.slane %v305, %v426
      %v428 = vlaneseq
      %v429 = vshrl.u32 %v428, 7
      %v430 = vsub.s32 1, %v429
      %v431 = vrot.slane %v306, %v430
      %v432 = vmul.f32 %v423, %v427
      %v433 = vmul.f32 %v422, %v431
      %434 = vst [vmem:[#allocation2 + $0x10] sm:$0xff] %v432
      %435 = vst [vmem:[#allocation2 + $0x18] sm:$0xff] %v433
      %436 = vrot.lane.b32.xlu0 %v394, 15
      %v437 = vpop.permute.xlu0 %436
      %438 = vrot.lane.b32.xlu0 %v395, 15
      %v439 = vpop.permute.xlu0 %438
      %vm440 = vcmp.lt.s32.totalorder %v401, 15
      %v441 = vsel %vm440, %v437, %v439
      %v442 = vsel %vm440, %v439, %v437
      %v443 = vlaneseq
      %v444 = vshrl.u32 %v443, 7
      %v445 = vsub.s32 2, %v444
      %v446 = vrot.slane %v305, %v445
      %v447 = vlaneseq
      %v448 = vshrl.u32 %v447, 7
      %v449 = vsub.s32 2, %v448
      %v450 = vrot.slane %v306, %v449
      %v451 = vmul.f32 %v442, %v446
      %v452 = vmul.f32 %v441, %v450
      %453 = vst [vmem:[#allocation2 + $0x20] sm:$0xff] %v451
      %454 = vst [vmem:[#allocation2 + $0x28] sm:$0xff] %v452
      %455 = vrot.lane.b32.xlu0 %v394, 1
      %v456 = vpop.permute.xlu0 %455
      %457 = vrot.lane.b32.xlu0 %v395, 1
      %v458 = vpop.permute.xlu0 %457
      %vm459 = vcmp.lt.s32.totalorder %v401, 1
      %v460 = vsel %vm459, %v456, %v458
      %v461 = vsel %vm459, %v458, %v456
      %v462 = vlaneseq
      %v463 = vshrl.u32 %v462, 7
      %v464 = vsub.s32 3, %v463
      %v465 = vrot.slane %v305, %v464
      %v466 = vlaneseq
      %v467 = vshrl.u32 %v466, 7
      %v468 = vsub.s32 3, %v467
      %v469 = vrot.slane %v306, %v468
      %v470 = vmul.f32 %v461, %v465
      %v471 = vmul.f32 %v460, %v469
      %472 = vst [vmem:[#allocation2 + $0x30] sm:$0xff] %v470
      %473 = vst [vmem:[#allocation2 + $0x38] sm:$0xff] %v471
      %474 = vst [vmem:[#allocation2 + $0x40] sm:$0xff] %v394
      %475 = vst [vmem:[#allocation2 + $0x48] sm:$0xff] %v395
      %476 = vrot.lane.b32.xlu0 %v394, 127
      %v477 = vpop.permute.xlu0 %476
      %478 = vrot.lane.b32.xlu0 %v395, 127
      %v479 = vpop.permute.xlu0 %478
      %vm480 = vcmp.lt.s32.totalorder %v401, 127
      %v481 = vsel %vm480, %v477, %v479
      %v482 = vsel %vm480, %v479, %v477
      %v483 = vlaneseq
      %v484 = vshrl.u32 %v483, 7
      %v485 = vsub.s32 5, %v484
      %v486 = vrot.slane %v305, %v485
      %v487 = vlaneseq
      %v488 = vshrl.u32 %v487, 7
      %v489 = vsub.s32 5, %v488
      %v490 = vrot.slane %v306, %v489
      %v491 = vmul.f32 %v481, %v486
      %v492 = vmul.f32 %v482, %v490
      %493 = vst [vmem:[#allocation2 + $0x50] sm:$0xff] %v491
      %494 = vst [vmem:[#allocation2 + $0x58] sm:$0xff] %v492
      %495 = vrot.lane.b32.xlu0 %v394, 113
      %v496 = vpop.permute.xlu0 %495
      %497 = vrot.lane.b32.xlu0 %v395, 113
      %v498 = vpop.permute.xlu0 %497
      %vm499 = vcmp.lt.s32.totalorder %v401, 113
      %v500 = vsel %vm499, %v496, %v498
      %v501 = vsel %vm499, %v498, %v496
      %v502 = vlaneseq
      %v503 = vshrl.u32 %v502, 7
      %v504 = vsub.s32 6, %v503
      %v505 = vrot.slane %v305, %v504
      %v506 = vlaneseq
      %v507 = vshrl.u32 %v506, 7
      %v508 = vsub.s32 6, %v507
      %v509 = vrot.slane %v306, %v508
      %v510 = vmul.f32 %v500, %v505
      %v511 = vmul.f32 %v501, %v509
      %512 = vst [vmem:[#allocation2 + $0x60] sm:$0xff] %v510
      %513 = vst [vmem:[#allocation2 + $0x68] sm:$0xff] %v511
      %514 = vrot.lane.b32.xlu0 %v394, 112
      %v515 = vpop.permute.xlu0 %514
      %516 = vrot.lane.b32.xlu0 %v395, 112
      %v517 = vpop.permute.xlu0 %516
      %vm518 = vcmp.lt.s32.totalorder %v401, 112
      %v519 = vsel %vm518, %v515, %v517
      %v520 = vsel %vm518, %v517, %v515
      %v521 = vlaneseq
      %v522 = vshrl.u32 %v521, 7
      %v523 = vsub.s32 7, %v522
      %v524 = vrot.slane %v305, %v523
      %v525 = vlaneseq
      %v526 = vshrl.u32 %v525, 7
      %v527 = vsub.s32 7, %v526
      %v528 = vrot.slane %v306, %v527
      %v529 = vmul.f32 %v519, %v524
      %v530 = vmul.f32 %v520, %v528
      %531 = vst [vmem:[#allocation2 + $0x70] sm:$0xff] %v529
      %532 = vst [vmem:[#allocation2 + $0x78] sm:$0xff] %v530
      %533 = vrot.lane.b32.xlu0 %v394, 111
      %v534 = vpop.permute.xlu0 %533
      %535 = vrot.lane.b32.xlu0 %v395, 111
      %v536 = vpop.permute.xlu0 %535
      %vm537 = vcmp.lt.s32.totalorder %v401, 111
      %v538 = vsel %vm537, %v534, %v536
      %v539 = vsel %vm537, %v536, %v534
      %v540 = vlaneseq
      %v541 = vshrl.u32 %v540, 7
      %v542 = vsub.s32 0, %v541
      %v543 = vrot.slane %v307, %v542
      %v544 = vlaneseq
      %v545 = vshrl.u32 %v544, 7
      %v546 = vsub.s32 0, %v545
      %v547 = vrot.slane %v308, %v546
      %v548 = vmul.f32 %v538, %v543
      %v549 = vmul.f32 %v539, %v547
      %550 = vst [vmem:[#allocation2 + $0x80] sm:$0xff] %v548
      %551 = vst [vmem:[#allocation2 + $0x88] sm:$0xff] %v549
      %v552 = vld [vmem:[%s6] sm:$0xf]
      %v553 = vld [vmem:[#allocation2] sm:$0xff]
      %v554 = vld [vmem:[#allocation2 + $0x8] sm:$0xff]
      %v555 = vld [vmem:[#allocation2 + $0x10] sm:$0xff]
      %v556 = vld [vmem:[#allocation2 + $0x18] sm:$0xff]
      %v557 = vld [vmem:[#allocation2 + $0x20] sm:$0xff]
      %v558 = vld [vmem:[#allocation2 + $0x28] sm:$0xff]
      %v559 = vld [vmem:[#allocation2 + $0x30] sm:$0xff]
      %v560 = vld [vmem:[#allocation2 + $0x38] sm:$0xff]
      %v561 = vld [vmem:[#allocation2 + $0x40] sm:$0xff]
      %v562 = vld [vmem:[#allocation2 + $0x48] sm:$0xff]
      %v563 = vld [vmem:[#allocation2 + $0x50] sm:$0xff]
      %v564 = vld [vmem:[#allocation2 + $0x58] sm:$0xff]
      %v565 = vld [vmem:[#allocation2 + $0x60] sm:$0xff]
      %v566 = vld [vmem:[#allocation2 + $0x68] sm:$0xff]
      %v567 = vld [vmem:[#allocation2 + $0x70] sm:$0xff]
      %v568 = vld [vmem:[#allocation2 + $0x78] sm:$0xff]
      %v569 = vld [vmem:[#allocation2 + $0x80] sm:$0xff]
      %v570 = vld [vmem:[#allocation2 + $0x88] sm:$0xff]
      %v571 = vpack.c.bf16 %v555, %v553
      %v572 = vpack.c.bf16 %v556, %v554
      %v573 = vpack.c.bf16 %v559, %v557
      %v574 = vpack.c.bf16 %v560, %v558
      %v575 = vpack.c.bf16 %v563, %v561
      %v576 = vpack.c.bf16 %v564, %v562
      %v577 = vpack.c.bf16 %v567, %v565
      %v578 = vpack.c.bf16 %v568, %v566
      %v579 = vpack.c.bf16 %v569, %v569
      %v580 = vpack.c.bf16 %v570, %v570
      %vm581 = vcmask 588800
      %v583 = vsel %vm581, %v552, 0
      %v586 = vsel %vm332, %v579, 0
      %v589 = vsel %vm332, %v580, 0
      %591 = vmatprep.subr.bf16.mxu0 0
      %592 = vmatpush1.bf16.msra.mxu0 0
      %593 = vmatprep.subr.bf16.mxu0 0
      %594 = vmatpush1.bf16.msra.mxu0 0
      %595 = vmatprep.subr.bf16.mxu0 0
      %596 = vmatpush1.bf16.msra.mxu0 0
      %597 = vmatprep.subr.bf16.mxu0 %v589
      %598 = vmatpush1.bf16.msra.mxu0 %v586
      %599 = vmatprep.subr.bf16.mxu0 %v578
      %600 = vmatpush1.bf16.msra.mxu0 %v577
      %601 = vmatprep.subr.bf16.mxu0 %v576
      %602 = vmatpush1.bf16.msra.mxu0 %v575
      %603 = vmatprep.subr.bf16.mxu0 %v574
      %604 = vmatpush1.bf16.msra.mxu0 %v573
      %605 = vmatprep.subr.bf16.mxu0 %v572
      %606 = vmatpush1.bf16.msra.mxu0 %v571
      %607 = vmatprep.subr.bf16.mxu0 0
      %608 = vmatpush2.bf16.msra.mxu0 0
      %609 = vmatprep.subr.bf16.mxu0 0
      %610 = vmatpush2.bf16.msra.mxu0 0
      %611 = vmatprep.subr.bf16.mxu0 0
      %612 = vmatpush2.bf16.msra.mxu0 0
      %613 = vmatprep.subr.bf16.mxu0 0
      %614 = vmatpush2.bf16.msra.mxu0 0
      %615 = vmatprep.subr.bf16.mxu0 0
      %616 = vmatpush2.bf16.msra.mxu0 0
      %617 = vmatprep.subr.bf16.mxu0 0
      %618 = vmatpush2.bf16.msra.mxu0 0
      %619 = vmatprep.subr.bf16.mxu0 0
      %620 = vmatpush2.bf16.msra.mxu0 0
      %621 = vmatprep.subr.bf16.mxu0 0
      %622 = vmatpush2.bf16.msra.mxu0 0
      %623 = vmatprep.mubr.bf16.mxu0 0
      %624 = vmatmul.mubr.bf16.gmra.mxu0 %v583
      %v625 = vpop.f32.mrf.mxu0
      %v626 = vadd.f32 0.0, %v625
      %v627 = vpop.f32.mrf.mxu0
      %v628 = vadd.f32 0.0, %v627
      %v629 = vpop.f32.mrf.mxu0
      %v630 = vpop.f32.mrf.mxu0
      %631 = vdwg.mxu0
      %v632 = vadd.f32 %v300, %v374
      %v633 = vadd.f32 %v301, %v376
      %v634 = vadd.f32 %v632, %v626
      %v635 = vadd.f32 %v633, %v628
      %636 = vst [vmem:[%s298] sm:$0xff] %v634
      %637 = vst [vmem:[%s298 + $0x8] sm:$0xff] %v635
      %p638 = scmp.lt.s32.totalorder %s18, 1
      %s639 = scalar_select %p638, %s18, 1
      %s640 = smul.addr %s639, 2
      %s641 = smul.addr %s640, 8
      %s642 = scalar_lea.vmem %s7, %s641
      // Predicated region
      $region49: #{four_conv_res_block.5} parent=47 // pred_check
        %p643 = pneg %p193
      $region50: #{four_conv_res_block.5} parent=47 // pred_check_branch
        %645 = sbr.rel (%p643) target = $region52
      $region51: #{four_conv_res_block.5} parent=47 // pred_region
        _
      $region52: #{four_conv_res_block.5} parent=47 // pred_fallthru
        _
    $region48: #{four_conv_res_block.5} parent=5 // pred_fallthru
      _
    %p646 = scmp.le.s32.totalorder 2, %s13
    // Predicated region
    $region53: #{four_conv_res_block.5} parent=5 // pred_check
      %p647 = pneg %p646
    $region54: #{four_conv_res_block.5} parent=5 // pred_check_branch
      %649 = sbr.rel (%p647) target = $region56
    $region55: #{four_conv_res_block.5} parent=5 // pred_region
      %s650 = ssub.s32 %s13, 2
      // Predicated region
      $region57: #{four_conv_res_block.5} parent=55 // pred_check
        %p651 = pneg %p199
      $region58: #{four_conv_res_block.5} parent=55 // pred_check_branch
        %653 = sbr.rel (%p651) target = $region60
      $region59: #{four_conv_res_block.5} parent=55 // pred_region
        %p654 = scmp.lt.s32.totalorder %s19, 1
        %s655 = scalar_select %p654, %s19, 1
        %s656 = smul.addr %s655, 2
        %s657 = smul.addr %s656, 8
        %s658 = scalar_lea.vmem %s7, %s657
      $region60: #{four_conv_res_block.5} parent=55 // pred_fallthru
        _
    $region56: #{four_conv_res_block.5} parent=5 // pred_fallthru
      _
  $region6: #{four_conv_res_block.5} parent=0 // loop_footer
    %s17 = sadd.s32 1, %s13
  $region7: #{four_conv_res_block.5} parent=0 // loop_footer_branch
    %12 = sbr.rel target = $region3
  $region8: #{four_conv_res_block.5} parent=0 // loop_exit
    _

// kernel: four_conv_res_block.4
$region0: #{four_conv_res_block.4}
  #allocation0 [shape = 'u32[]', space=smem, size = 0x4, offset = 0x4, fixed_abs, tag = 'smem constant byte address 0x4 - core index']
  #allocation1 [shape = 'u32[144,128]{1,0:T(1,128)}', space=vmem, size = 0x12000, scoped, tag = 'internal scratch']
  #allocation2 [shape = 'f32[72,256]{1,0:T(8,128)}', space=vmem, size = 0x12000, scoped, tag = 'scratch operand']
  #allocation3 [shape = 'f32[8,1]{1,0:T(8,128)}', space=vmem, size = 0x1000, scoped, tag = 'scratch operand']
  #allocation4 [shape = 'f32[8,1]{1,0:T(8,128)}', space=vmem, size = 0x1000, scoped, tag = 'scratch operand']
  %s0 = inlined_call_operand.vmem [shape: f32[2,8,256], index: 0, kind: input, shape index: {}]
  %s1 = inlined_call_operand.vmem [shape: f32[9,256], index: 1, kind: input, shape index: {}]
  %s2 = inlined_call_operand.vmem [shape: f32[8,4], index: 2, kind: input, shape index: {}]
  %s3 = inlined_call_operand.vmem [shape: f32[8,2], index: 3, kind: input, shape index: {}]
  %s4 = inlined_call_operand.vmem [shape: bf16[8,72], index: 4, kind: input, shape index: {}]
  %s5 = inlined_call_operand.vmem [shape: bf16[2,8,256], index: 5, kind: output, shape index: {0}]
  %s6 = inlined_call_operand.vmem [shape: f32[8,2], index: 6, kind: output, shape index: {1}]
  %7 = xla_tuple %s5, %s6
  %s8 = sld [smem:[#allocation0]]
  $region69: #{four_conv_res_block.4} parent=0
    _
  %s10 = ssub.s32 1, %s8
  %s11 = scalar_select 0, %s10, %s8
  loop: start=0, step=1, limit=4
  $region2: #{four_conv_res_block.4} parent=0 // loop_pre_header
    _
  $region3: #{four_conv_res_block.4} parent=0 // loop_header
    %s13 = sphi 0, %s17
    %p14 = scmp.ge.s32.totalorder %s13, 4
    %s23 = sphi 0, %s25
    %s26 = sphi 0, %s23
    %s27 = sphi 0, %s26
    %s43 = sphi 0, %s27
    %s47 = sphi 0, %s47
    %s49 = sphi 0, %s47
    %s50 = sphi 0, %s49
    %s64 = sphi 0, %s50
    %s68 = sphi 0, %s68
    %s70 = sphi 0, %s68
    %s71 = sphi 0, %s70
    %s85 = sphi 0, %s71
    %s89 = sphi 0, %s89
    %s91 = sphi 0, %s89
    %s92 = sphi 0, %s91
    %s106 = sphi 0, %s92
    %s110 = sphi 0, %s110
    %s112 = sphi 0, %s110
    %s113 = sphi 0, %s112
    %s127 = sphi 0, %s113
    %s133 = sphi 0, %s135
    %s136 = sphi 0, %s133
    %s137 = sphi 0, %s136
    %s153 = sphi 0, %s137
    %s157 = sphi 0, %s157
    %s159 = sphi 0, %s157
    %s160 = sphi 0, %s159
    %s174 = sphi 0, %s160
  $region4: #{four_conv_res_block.4} parent=0 // loop_header_branch
    %16 = sbr.rel (%p14) target = $region8
  $region5: #{four_conv_res_block.4} parent=0 // loop_body
    %s18 = ssub.s32 %s13, 1
    %s19 = ssub.s32 %s13, 2
    %s20 = sadd.s32 %s13, 1
    %s21 = ssub.s32 %s13, %s20
    %p22 = scmp.eq.s32.totalorder %s21, 0
    %s24 = sadd.s32 %s23, 1
    %s25 = scalar_select %p22, %s23, %s24
    %p28 = pneg %p22
    %p29 = scmp.eq.s32.totalorder %s13, 1
    %p30 = por %p28, %p29
    %p31 = scmp.ne.s32.totalorder %s23, %s26
    %p32 = scmp.eq.s32.totalorder %s13, 0
    %p33 = por %p31, %p32
    %p34 = scmp.ne.s32.totalorder %s23, %s26
    %p35 = scmp.eq.s32.totalorder %s18, 1
    %p36 = por %p34, %p35
    %p37 = scmp.ne.s32.totalorder %s26, %s27
    %p38 = scmp.eq.s32.totalorder %s18, 0
    %p39 = por %p37, %p38
    %p40 = scmp.ne.s32.totalorder %s26, %s27
    %p41 = scmp.eq.s32.totalorder %s19, 1
    %p42 = por %p40, %p41
    %p44 = scmp.ne.s32.totalorder %s27, %s43
    %p45 = scmp.eq.s32.totalorder %s19, 0
    %p46 = por %p44, %p45
    %s48 = sadd.s32 %s47, 1
    %p51 = scmp.eq.s32.totalorder %s13, 1
    %p52 = scmp.ne.s32.totalorder %s47, %s49
    %p53 = scmp.eq.s32.totalorder %s13, 0
    %p54 = por %p52, %p53
    %p55 = scmp.ne.s32.totalorder %s47, %s49
    %p56 = scmp.eq.s32.totalorder %s18, 1
    %p57 = por %p55, %p56
    %p58 = scmp.ne.s32.totalorder %s49, %s50
    %p59 = scmp.eq.s32.totalorder %s18, 0
    %p60 = por %p58, %p59
    %p61 = scmp.ne.s32.totalorder %s49, %s50
    %p62 = scmp.eq.s32.totalorder %s19, 1
    %p63 = por %p61, %p62
    %p65 = scmp.ne.s32.totalorder %s50, %s64
    %p66 = scmp.eq.s32.totalorder %s19, 0
    %p67 = por %p65, %p66
    %s69 = sadd.s32 %s68, 1
    %p72 = scmp.eq.s32.totalorder %s13, 1
    %p73 = scmp.ne.s32.totalorder %s68, %s70
    %p74 = scmp.eq.s32.totalorder %s13, 0
    %p75 = por %p73, %p74
    %p76 = scmp.ne.s32.totalorder %s68, %s70
    %p77 = scmp.eq.s32.totalorder %s18, 1
    %p78 = por %p76, %p77
    %p79 = scmp.ne.s32.totalorder %s70, %s71
    %p80 = scmp.eq.s32.totalorder %s18, 0
    %p81 = por %p79, %p80
    %p82 = scmp.ne.s32.totalorder %s70, %s71
    %p83 = scmp.eq.s32.totalorder %s19, 1
    %p84 = por %p82, %p83
    %p86 = scmp.ne.s32.totalorder %s71, %s85
    %p87 = scmp.eq.s32.totalorder %s19, 0
    %p88 = por %p86, %p87
    %s90 = sadd.s32 %s89, 1
    %p93 = scmp.eq.s32.totalorder %s13, 1
    %p94 = scmp.ne.s32.totalorder %s89, %s91
    %p95 = scmp.eq.s32.totalorder %s13, 0
    %p96 = por %p94, %p95
    %p97 = scmp.ne.s32.totalorder %s89, %s91
    %p98 = scmp.eq.s32.totalorder %s18, 1
    %p99 = por %p97, %p98
    %p100 = scmp.ne.s32.totalorder %s91, %s92
    %p101 = scmp.eq.s32.totalorder %s18, 0
    %p102 = por %p100, %p101
    %p103 = scmp.ne.s32.totalorder %s91, %s92
    %p104 = scmp.eq.s32.totalorder %s19, 1
    %p105 = por %p103, %p104
    %p107 = scmp.ne.s32.totalorder %s92, %s106
    %p108 = scmp.eq.s32.totalorder %s19, 0
    %p109 = por %p107, %p108
    %s111 = sadd.s32 %s110, 1
    %p114 = scmp.eq.s32.totalorder %s13, 1
    %p115 = scmp.ne.s32.totalorder %s110, %s112
    %p116 = scmp.eq.s32.totalorder %s13, 0
    %p117 = por %p115, %p116
    %p118 = scmp.ne.s32.totalorder %s110, %s112
    %p119 = scmp.eq.s32.totalorder %s18, 1
    %p120 = por %p118, %p119
    %p121 = scmp.ne.s32.totalorder %s112, %s113
    %p122 = scmp.eq.s32.totalorder %s18, 0
    %p123 = por %p121, %p122
    %p124 = scmp.ne.s32.totalorder %s112, %s113
    %p125 = scmp.eq.s32.totalorder %s19, 1
    %p126 = por %p124, %p125
    %p128 = scmp.ne.s32.totalorder %s113, %s127
    %p129 = scmp.eq.s32.totalorder %s19, 0
    %p130 = por %p128, %p129
    %s131 = ssub.s32 %s13, %s20
    %p132 = scmp.eq.s32.totalorder %s131, 0
    %s134 = sadd.s32 %s133, 1
    %s135 = scalar_select %p132, %s133, %s134
    %p138 = pneg %p132
    %p139 = scmp.eq.s32.totalorder %s13, 1
    %p140 = por %p138, %p139
    %p141 = scmp.ne.s32.totalorder %s133, %s136
    %p142 = scmp.eq.s32.totalorder %s13, 0
    %p143 = por %p141, %p142
    %p144 = scmp.ne.s32.totalorder %s133, %s136
    %p145 = scmp.eq.s32.totalorder %s18, 1
    %p146 = por %p144, %p145
    %p147 = scmp.ne.s32.totalorder %s136, %s137
    %p148 = scmp.eq.s32.totalorder %s18, 0
    %p149 = por %p147, %p148
    %p150 = scmp.ne.s32.totalorder %s136, %s137
    %p151 = scmp.eq.s32.totalorder %s19, 1
    %p152 = por %p150, %p151
    %p154 = scmp.ne.s32.totalorder %s137, %s153
    %p155 = scmp.eq.s32.totalorder %s19, 0
    %p156 = por %p154, %p155
    %s158 = sadd.s32 %s157, 1
    %p161 = scmp.eq.s32.totalorder %s13, 1
    %p162 = scmp.ne.s32.totalorder %s157, %s159
    %p163 = scmp.eq.s32.totalorder %s13, 0
    %p164 = por %p162, %p163
    %p165 = scmp.ne.s32.totalorder %s157, %s159
    %p166 = scmp.eq.s32.totalorder %s18, 1
    %p167 = por %p165, %p166
    %p168 = scmp.ne.s32.totalorder %s159, %s160
    %p169 = scmp.eq.s32.totalorder %s18, 0
    %p170 = por %p168, %p169
    %p171 = scmp.ne.s32.totalorder %s159, %s160
    %p172 = scmp.eq.s32.totalorder %s19, 1
    %p173 = por %p171, %p172
    %p175 = scmp.ne.s32.totalorder %s160, %s174
    %p176 = scmp.eq.s32.totalorder %s19, 0
    %p177 = por %p175, %p176
    %p178 = scmp.le.s32.totalorder 1, %s13
    %p179 = scmp.lt.s32.totalorder %s13, 3
    %p180 = pnand %p178, %p179
    %p181 = pneg %p180
    // Predicated region
    $region9: #{four_conv_res_block.4} parent=5 // pred_check
      _
    $region10: #{four_conv_res_block.4} parent=5 // pred_check_branch
      %183 = sbr.rel (%p180) target = $region12
    $region11: #{four_conv_res_block.4} parent=5 // pred_region
      %s184 = ssub.s32 %s13, 1
      // Predicated region
      $region13: #{four_conv_res_block.4} parent=11 // pred_check
        %p185 = pneg %p60
      $region14: #{four_conv_res_block.4} parent=11 // pred_check_branch
        %187 = sbr.rel (%p185) target = $region16
      $region15: #{four_conv_res_block.4} parent=11 // pred_region
        _
      $region16: #{four_conv_res_block.4} parent=11 // pred_fallthru
        _
      // Predicated region
      $region17: #{four_conv_res_block.4} parent=11 // pred_check
        %p188 = pneg %p81
      $region18: #{four_conv_res_block.4} parent=11 // pred_check_branch
        %190 = sbr.rel (%p188) target = $region20
      $region19: #{four_conv_res_block.4} parent=11 // pred_region
        _
      $region20: #{four_conv_res_block.4} parent=11 // pred_fallthru
        _
      // Predicated region
      $region21: #{four_conv_res_block.4} parent=11 // pred_check
        %p191 = pneg %p102
      $region22: #{four_conv_res_block.4} parent=11 // pred_check_branch
        %193 = sbr.rel (%p191) target = $region24
      $region23: #{four_conv_res_block.4} parent=11 // pred_region
        _
      $region24: #{four_conv_res_block.4} parent=11 // pred_fallthru
        _
      // Predicated region
      $region25: #{four_conv_res_block.4} parent=11 // pred_check
        %p194 = pneg %p123
      $region26: #{four_conv_res_block.4} parent=11 // pred_check_branch
        %196 = sbr.rel (%p194) target = $region28
      $region27: #{four_conv_res_block.4} parent=11 // pred_region
        _
      $region28: #{four_conv_res_block.4} parent=11 // pred_fallthru
        _
    $region12: #{four_conv_res_block.4} parent=5 // pred_fallthru
      _
    %p197 = scmp.lt.s32.totalorder %s13, 2
    // Predicated region
    $region29: #{four_conv_res_block.4} parent=5 // pred_check
      %p198 = pneg %p197
    $region30: #{four_conv_res_block.4} parent=5 // pred_check_branch
      %200 = sbr.rel (%p198) target = $region32
    $region31: #{four_conv_res_block.4} parent=5 // pred_region
      // Predicated region
      $region33: #{four_conv_res_block.4} parent=31 // pred_check
        %p201 = pneg %p33
      $region34: #{four_conv_res_block.4} parent=31 // pred_check_branch
        %203 = sbr.rel (%p201) target = $region36
      $region35: #{four_conv_res_block.4} parent=31 // pred_region
        %p204 = scmp.lt.s32.totalorder %s13, 1
        %s205 = scalar_select %p204, %s13, 1
        %s206 = smul.addr %s205, 2
        %s207 = smul.addr %s206, 8
        %s208 = scalar_lea.vmem %s0, %s207
      $region36: #{four_conv_res_block.4} parent=31 // pred_fallthru
        _
    $region32: #{four_conv_res_block.4} parent=5 // pred_fallthru
      _
    %p209 = scmp.le.s32.totalorder 1, %s13
    %p210 = scmp.lt.s32.totalorder %s13, 3
    %p211 = pnand %p209, %p210
    %p212 = pneg %p211
    // Predicated region
    $region37: #{four_conv_res_block.4} parent=5 // pred_check
      _
    $region38: #{four_conv_res_block.4} parent=5 // pred_check_branch
      %214 = sbr.rel (%p211) target = $region40
    $region39: #{four_conv_res_block.4} parent=5 // pred_region
      %s215 = ssub.s32 %s13, 1
      %p216 = scmp.lt.s32.totalorder %s18, 1
      %s217 = scalar_select %p216, %s18, 1
      %s218 = smul.addr %s217, 2
      %s219 = smul.addr %s218, 8
      %s220 = scalar_lea.vmem %s0, %s219
      %p221 = pneg %p39
      %p222 = pneg %p36
      %p223 = pneg %p60
      %p224 = pneg %p57
      %p225 = pneg %p81
      %p226 = pneg %p78
      %p227 = pneg %p102
      %p228 = pneg %p99
      %p229 = pneg %p123
      %p230 = pneg %p120
      %p231 = pneg %p149
      %p232 = pneg %p146
      %p233 = scmp.lt.s32.totalorder %s18, 1
      %s234 = scalar_select %p233, %s18, 1
      %s235 = smul.addr %s234, 2
      %s236 = smul.addr %s235, 4
      %s237 = scalar_lea.vmem %s5, %s236
      %p238 = pneg %p170
      %p239 = pneg %p167
      %p240 = scmp.lt.s32.totalorder %s18, 1
      %s241 = scalar_select %p240, %s18, 1
      %s242 = smul.addr %s241, 2
      %s243 = smul.addr %s242, 8
      %s244 = scalar_lea.vmem %s0, %s243
      %p245 = scmp.lt.s32.totalorder %s18, 1
      %s246 = scalar_select %p245, %s18, 1
      %s247 = smul.addr %s246, 2
      %s248 = smul.addr %s247, 4
      %s249 = scalar_lea.vmem %s5, %s248
      %p251 = scmp.eq.s32.totalorder %s18, 0
      // Predicated region
      $region41: #{four_conv_res_block.4} parent=39 // pred_check
        %p252 = pneg %p251
      $region42: #{four_conv_res_block.4} parent=39 // pred_check_branch
        %254 = sbr.rel (%p252) target = $region44
      $region43: #{four_conv_res_block.4} parent=39 // pred_region
        %vm255 = vcmask 7168
        %256 = vst.msk [vmem:[#allocation3] sm:$0xff] %vm255, 0.0
        %257 = vst.msk [vmem:[#allocation4] sm:$0xff] %vm255, 0.0
      $region44: #{four_conv_res_block.4} parent=39 // pred_fallthru
        _
      %v258 = vld [vmem:[%s244] sm:$0xff]
      %v259 = vld [vmem:[%s244 + $0x8] sm:$0xff]
      %v260 = vld [vmem:[%s1] sm:$0xff]
      %v261 = vld [vmem:[%s1 + $0x8] sm:$0xff]
      %v262 = vld [vmem:[%s1 + $0x10] sm:$0x1]
      %v263 = vld [vmem:[%s1 + $0x18] sm:$0x1]
      %v264 = vld [vmem:[%s2] sm:$0xff]
      %266 = vset.pattern.permute.xlu0 2
      %267 = vperm.xlu0 %266, %v264
      %v268 = vpop.permute.xlu0 %267
      %v270 = vmul.f32 %v258, %v268
      %v271 = vmul.f32 %v259, %v268
      %272 = vset.pattern.permute.xlu0 3
      %273 = vperm.xlu0 %272, %v264
      %v274 = vpop.permute.xlu0 %273
      %v276 = vadd.f32 %v270, %v274
      %v277 = vadd.f32 %v271, %v274
      %v278 = vmax.f32 %v276, 0.0
      %v279 = vmax.f32 %v277, 0.0
      %280 = vrot.lane.b32.xlu0 %v278, 17
      %v281 = vpop.permute.xlu0 %280
      %282 = vrot.lane.b32.xlu0 %v279, 17
      %v283 = vpop.permute.xlu0 %282
      %v284 = vlaneseq
      %v285 = vand.u32 %v284, 127
      %vm286 = vcmp.lt.s32.totalorder %v285, 17
      %v287 = vsel %vm286, %v281, %v283
      %v288 = vsel %vm286, %v283, %v281
      %v289 = vlaneseq
      %v290 = vshrl.u32 %v289, 7
      %v291 = vsub.s32 0, %v290
      %v292 = vrot.slane %v260, %v291
      %v293 = vlaneseq
      %v294 = vshrl.u32 %v293, 7
      %v295 = vsub.s32 0, %v294
      %v296 = vrot.slane %v261, %v295
      %v297 = vmul.f32 %v288, %v292
      %v298 = vmul.f32 %v287, %v296
      %299 = vst [vmem:[#allocation2] sm:$0xff] %v297
      %300 = vst [vmem:[#allocation2 + $0x8] sm:$0xff] %v298
      %301 = vrot.lane.b32.xlu0 %v278, 16
      %v302 = vpop.permute.xlu0 %301
      %303 = vrot.lane.b32.xlu0 %v279, 16
      %v304 = vpop.permute.xlu0 %303
      %vm305 = vcmp.lt.s32.totalorder %v285, 16
      %v306 = vsel %vm305, %v302, %v304
      %v307 = vsel %vm305, %v304, %v302
      %v308 = vlaneseq
      %v309 = vshrl.u32 %v308, 7
      %v310 = vsub.s32 1, %v309
      %v311 = vrot.slane %v260, %v310
      %v312 = vlaneseq
      %v313 = vshrl.u32 %v312, 7
      %v314 = vsub.s32 1, %v313
      %v315 = vrot.slane %v261, %v314
      %v316 = vmul.f32 %v307, %v311
      %v317 = vmul.f32 %v306, %v315
      %318 = vst [vmem:[#allocation2 + $0x10] sm:$0xff] %v316
      %319 = vst [vmem:[#allocation2 + $0x18] sm:$0xff] %v317
      %320 = vrot.lane.b32.xlu0 %v278, 15
      %v321 = vpop.permute.xlu0 %320
      %322 = vrot.lane.b32.xlu0 %v279, 15
      %v323 = vpop.permute.xlu0 %322
      %vm324 = vcmp.lt.s32.totalorder %v285, 15
      %v325 = vsel %vm324, %v321, %v323
      %v326 = vsel %vm324, %v323, %v321
      %v327 = vlaneseq
      %v328 = vshrl.u32 %v327, 7
      %v329 = vsub.s32 2, %v328
      %v330 = vrot.slane %v260, %v329
      %v331 = vlaneseq
      %v332 = vshrl.u32 %v331, 7
      %v333 = vsub.s32 2, %v332
      %v334 = vrot.slane %v261, %v333
      %v335 = vmul.f32 %v326, %v330
      %v336 = vmul.f32 %v325, %v334
      %337 = vst [vmem:[#allocation2 + $0x20] sm:$0xff] %v335
      %338 = vst [vmem:[#allocation2 + $0x28] sm:$0xff] %v336
      %339 = vrot.lane.b32.xlu0 %v278, 1
      %v340 = vpop.permute.xlu0 %339
      %341 = vrot.lane.b32.xlu0 %v279, 1
      %v342 = vpop.permute.xlu0 %341
      %vm343 = vcmp.lt.s32.totalorder %v285, 1
      %v344 = vsel %vm343, %v340, %v342
      %v345 = vsel %vm343, %v342, %v340
      %v346 = vlaneseq
      %v347 = vshrl.u32 %v346, 7
      %v348 = vsub.s32 3, %v347
      %v349 = vrot.slane %v260, %v348
      %v350 = vlaneseq
      %v351 = vshrl.u32 %v350, 7
      %v352 = vsub.s32 3, %v351
      %v353 = vrot.slane %v261, %v352
      %v354 = vmul.f32 %v345, %v349
      %v355 = vmul.f32 %v344, %v353
      %356 = vst [vmem:[#allocation2 + $0x30] sm:$0xff] %v354
      %357 = vst [vmem:[#allocation2 + $0x38] sm:$0xff] %v355
      %358 = vst [vmem:[#allocation2 + $0x40] sm:$0xff] %v278
      %359 = vst [vmem:[#allocation2 + $0x48] sm:$0xff] %v279
      %360 = vrot.lane.b32.xlu0 %v278, 127
      %v361 = vpop.permute.xlu0 %360
      %362 = vrot.lane.b32.xlu0 %v279, 127
      %v363 = vpop.permute.xlu0 %362
      %vm364 = vcmp.lt.s32.totalorder %v285, 127
      %v365 = vsel %vm364, %v361, %v363
      %v366 = vsel %vm364, %v363, %v361
      %v367 = vlaneseq
      %v368 = vshrl.u32 %v367, 7
      %v369 = vsub.s32 5, %v368
      %v370 = vrot.slane %v260, %v369
      %v371 = vlaneseq
      %v372 = vshrl.u32 %v371, 7
      %v373 = vsub.s32 5, %v372
      %v374 = vrot.slane %v261, %v373
      %v375 = vmul.f32 %v365, %v370
      %v376 = vmul.f32 %v366, %v374
      %377 = vst [vmem:[#allocation2 + $0x50] sm:$0xff] %v375
      %378 = vst [vmem:[#allocation2 + $0x58] sm:$0xff] %v376
      %379 = vrot.lane.b32.xlu0 %v278, 113
      %v380 = vpop.permute.xlu0 %379
      %381 = vrot.lane.b32.xlu0 %v279, 113
      %v382 = vpop.permute.xlu0 %381
      %vm383 = vcmp.lt.s32.totalorder %v285, 113
      %v384 = vsel %vm383, %v380, %v382
      %v385 = vsel %vm383, %v382, %v380
      %v386 = vlaneseq
      %v387 = vshrl.u32 %v386, 7
      %v388 = vsub.s32 6, %v387
      %v389 = vrot.slane %v260, %v388
      %v390 = vlaneseq
      %v391 = vshrl.u32 %v390, 7
      %v392 = vsub.s32 6, %v391
      %v393 = vrot.slane %v261, %v392
      %v394 = vmul.f32 %v384, %v389
      %v395 = vmul.f32 %v385, %v393
      %396 = vst [vmem:[#allocation2 + $0x60] sm:$0xff] %v394
      %397 = vst [vmem:[#allocation2 + $0x68] sm:$0xff] %v395
      %398 = vrot.lane.b32.xlu0 %v278, 112
      %v399 = vpop.permute.xlu0 %398
      %400 = vrot.lane.b32.xlu0 %v279, 112
      %v401 = vpop.permute.xlu0 %400
      %vm402 = vcmp.lt.s32.totalorder %v285, 112
      %v403 = vsel %vm402, %v399, %v401
      %v404 = vsel %vm402, %v401, %v399
      %v405 = vlaneseq
      %v406 = vshrl.u32 %v405, 7
      %v407 = vsub.s32 7, %v406
      %v408 = vrot.slane %v260, %v407
      %v409 = vlaneseq
      %v410 = vshrl.u32 %v409, 7
      %v411 = vsub.s32 7, %v410
      %v412 = vrot.slane %v261, %v411
      %v413 = vmul.f32 %v403, %v408
      %v414 = vmul.f32 %v404, %v412
      %415 = vst [vmem:[#allocation2 + $0x70] sm:$0xff] %v413
      %416 = vst [vmem:[#allocation2 + $0x78] sm:$0xff] %v414
      %417 = vrot.lane.b32.xlu0 %v278, 111
      %v418 = vpop.permute.xlu0 %417
      %419 = vrot.lane.b32.xlu0 %v279, 111
      %v420 = vpop.permute.xlu0 %419
      %vm421 = vcmp.lt.s32.totalorder %v285, 111
      %v422 = vsel %vm421, %v418, %v420
      %v423 = vsel %vm421, %v420, %v418
      %v424 = vlaneseq
      %v425 = vshrl.u32 %v424, 7
      %v426 = vsub.s32 0, %v425
      %v427 = vrot.slane %v262, %v426
      %v428 = vlaneseq
      %v429 = vshrl.u32 %v428, 7
      %v430 = vsub.s32 0, %v429
      %v431 = vrot.slane %v263, %v430
      %v432 = vmul.f32 %v422, %v427
      %v433 = vmul.f32 %v423, %v431
      %434 = vst [vmem:[#allocation2 + $0x80] sm:$0xff] %v432
      %435 = vst [vmem:[#allocation2 + $0x88] sm:$0xff] %v433
      %v436 = vld [vmem:[%s4] sm:$0xf]
      %v437 = vld [vmem:[#allocation2] sm:$0xff]
      %v438 = vld [vmem:[#allocation2 + $0x8] sm:$0xff]
      %v439 = vld [vmem:[#allocation2 + $0x10] sm:$0xff]
      %v440 = vld [vmem:[#allocation2 + $0x18] sm:$0xff]
      %v441 = vld [vmem:[#allocation2 + $0x20] sm:$0xff]
      %v442 = vld [vmem:[#allocation2 + $0x28] sm:$0xff]
      %v443 = vld [vmem:[#allocation2 + $0x30] sm:$0xff]
      %v444 = vld [vmem:[#allocation2 + $0x38] sm:$0xff]
      %v445 = vld [vmem:[#allocation2 + $0x40] sm:$0xff]
      %v446 = vld [vmem:[#allocation2 + $0x48] sm:$0xff]
      %v447 = vld [vmem:[#allocation2 + $0x50] sm:$0xff]
      %v448 = vld [vmem:[#allocation2 + $0x58] sm:$0xff]
      %v449 = vld [vmem:[#allocation2 + $0x60] sm:$0xff]
      %v450 = vld [vmem:[#allocation2 + $0x68] sm:$0xff]
      %v451 = vld [vmem:[#allocation2 + $0x70] sm:$0xff]
      %v452 = vld [vmem:[#allocation2 + $0x78] sm:$0xff]
      %v453 = vld [vmem:[#allocation2 + $0x80] sm:$0xff]
      %v454 = vld [vmem:[#allocation2 + $0x88] sm:$0xff]
      %v455 = vpack.c.bf16 %v439, %v437
      %v456 = vpack.c.bf16 %v440, %v438
      %v457 = vpack.c.bf16 %v443, %v441
      %v458 = vpack.c.bf16 %v444, %v442
      %v459 = vpack.c.bf16 %v447, %v445
      %v460 = vpack.c.bf16 %v448, %v446
      %v461 = vpack.c.bf16 %v451, %v449
      %v462 = vpack.c.bf16 %v452, %v450
      %v463 = vpack.c.bf16 %v453, %v453
      %v464 = vpack.c.bf16 %v454, %v454
      %vm465 = vcmask 588800
      %v467 = vsel %vm465, %v436, 0
      %vm469 = vcmask 1043456
      %v471 = vsel %vm469, %v463, 0
      %v474 = vsel %vm469, %v464, 0
      %476 = vmatprep.subr.bf16.mxu0 0
      %477 = vmatpush1.bf16.msra.mxu0 0
      %478 = vmatprep.subr.bf16.mxu0 0
      %479 = vmatpush1.bf16.msra.mxu0 0
      %480 = vmatprep.subr.bf16.mxu0 0
      %481 = vmatpush1.bf16.msra.mxu0 0
      %482 = vmatprep.subr.bf16.mxu0 %v474
      %483 = vmatpush1.bf16.msra.mxu0 %v471
      %484 = vmatprep.subr.bf16.mxu0 %v462
      %485 = vmatpush1.bf16.msra.mxu0 %v461
      %486 = vmatprep.subr.bf16.mxu0 %v460
      %487 = vmatpush1.bf16.msra.mxu0 %v459
      %488 = vmatprep.subr.bf16.mxu0 %v458
      %489 = vmatpush1.bf16.msra.mxu0 %v457
      %490 = vmatprep.subr.bf16.mxu0 %v456
      %491 = vmatpush1.bf16.msra.mxu0 %v455
      %492 = vmatprep.subr.bf16.mxu0 0
      %493 = vmatpush2.bf16.msra.mxu0 0
      %494 = vmatprep.subr.bf16.mxu0 0
      %495 = vmatpush2.bf16.msra.mxu0 0
      %496 = vmatprep.subr.bf16.mxu0 0
      %497 = vmatpush2.bf16.msra.mxu0 0
      %498 = vmatprep.subr.bf16.mxu0 0
      %499 = vmatpush2.bf16.msra.mxu0 0
      %500 = vmatprep.subr.bf16.mxu0 0
      %501 = vmatpush2.bf16.msra.mxu0 0
      %502 = vmatprep.subr.bf16.mxu0 0
      %503 = vmatpush2.bf16.msra.mxu0 0
      %504 = vmatprep.subr.bf16.mxu0 0
      %505 = vmatpush2.bf16.msra.mxu0 0
      %506 = vmatprep.subr.bf16.mxu0 0
      %507 = vmatpush2.bf16.msra.mxu0 0
      %508 = vmatprep.mubr.bf16.mxu0 0
      %509 = vmatmul.mubr.bf16.gmra.mxu0 %v467
      %v510 = vpop.f32.mrf.mxu0
      %v511 = vadd.f32 0.0, %v510
      %v512 = vpop.f32.mrf.mxu0
      %v513 = vadd.f32 0.0, %v512
      %v514 = vpop.f32.mrf.mxu0
      %v515 = vpop.f32.mrf.mxu0
      %516 = vdwg.mxu0
      %v517 = vpack.c.bf16 %v511, %v511
      %v518 = vpack.c.bf16 %v513, %v513
      %v521 = vunpack.c.l.b16 %v517
      %v522 = vunpack.c.l.b16 %v518
      %v523 = vpack.c.b16 %v522, %v521
      %525 = vst [vmem:[%s249] sm:$0xff] %v523
      %v526 = vld [vmem:[#allocation3] sm:$0xff]
      %v527 = vadd.f32 %v511, %v513
      %528 = vadd.xlane.f32.xlu0 %v527
      %v529 = vpop.xlane.xlu0 %528
      %v530 = vadd.f32 %v526, %v529
      %vm531 = vcmask 7168
      %532 = vst.msk [vmem:[#allocation3] sm:$0xff] %vm531, %v530
      %v533 = vld [vmem:[#allocation4] sm:$0xff]
      %v534 = vmul.f32 %v511, %v511
      %v535 = vmul.f32 %v513, %v513
      %v536 = vadd.f32 %v534, %v535
      %537 = vadd.xlane.f32.xlu0 %v536
      %v538 = vpop.xlane.xlu0 %537
      %v539 = vadd.f32 %v533, %v538
      %540 = vst.msk [vmem:[#allocation4] sm:$0xff] %vm531, %v539
      %p541 = scmp.eq.s32.totalorder %s18, 1
      // Predicated region
      $region45: #{four_conv_res_block.4} parent=39 // pred_check
        %p542 = pneg %p541
      $region46: #{four_conv_res_block.4} parent=39 // pred_check_branch
        %544 = sbr.rel (%p542) target = $region48
      $region47: #{four_conv_res_block.4} parent=39 // pred_region
        %v545 = vld [vmem:[#allocation3] sm:$0xff]
        %v546 = vmul.f32 %v545, 0.001953125
        %v547 = vld [vmem:[#allocation4] sm:$0xff]
        %v548 = vmul.f32 %v547, 0.001953125
        %v549 = vmul.f32 %v546, %v546
        %v550 = vsub.f32 %v548, %v549
        %v551 = vadd.f32 %v550, 1e-05
        %v552 = vrsqrt.pop %v551
        %v553 = vld [vmem:[%s3] sm:$0xff]
        %v554 = vmul.f32 %v553, %v552
        %555 = vst.msk [vmem:[%s6] sm:$0xff] %vm531, %v554
        %v556 = vld [vmem:[%s3] sm:$0xff]
        %v557 = vmul.f32 %v546, %v554
        %559 = vrot.lane.b32.xlu0 %v557, 1
        %v560 = vpop.permute.xlu0 %559
        %v562 = vsub.f32 %v556, %v560
        %vm563 = vcmask 15368
        %564 = vst.msk [vmem:[%s6] sm:$0xff] %vm563, %v562
      $region48: #{four_conv_res_block.4} parent=39 // pred_fallthru
        _
      %p565 = scmp.lt.s32.totalorder %s18, 1
      %s566 = scalar_select %p565, %s18, 1
      %s567 = smul.addr %s566, 2
      %s568 = smul.addr %s567, 4
      %s569 = scalar_lea.vmem %s5, %s568
      // Predicated region
      $region49: #{four_conv_res_block.4} parent=39 // pred_check
        %p570 = pneg %p146
      $region50: #{four_conv_res_block.4} parent=39 // pred_check_branch
        %572 = sbr.rel (%p570) target = $region52
      $region51: #{four_conv_res_block.4} parent=39 // pred_region
        _
      $region52: #{four_conv_res_block.4} parent=39 // pred_fallthru
        _
      // Predicated region
      $region53: #{four_conv_res_block.4} parent=39 // pred_check
        %p573 = pneg %p167
      $region54: #{four_conv_res_block.4} parent=39 // pred_check_branch
        %575 = sbr.rel (%p573) target = $region56
      $region55: #{four_conv_res_block.4} parent=39 // pred_region
        _
      $region56: #{four_conv_res_block.4} parent=39 // pred_fallthru
        _
      // Predicated region
      $region57: #{four_conv_res_block.4} parent=39 // pred_check
        %p576 = pneg %p167
      $region58: #{four_conv_res_block.4} parent=39 // pred_check_branch
        %578 = sbr.rel (%p576) target = $region60
      $region59: #{four_conv_res_block.4} parent=39 // pred_region
        _
      $region60: #{four_conv_res_block.4} parent=39 // pred_fallthru
        _
    $region40: #{four_conv_res_block.4} parent=5 // pred_fallthru
      _
    %p579 = scmp.le.s32.totalorder 2, %s13
    // Predicated region
    $region61: #{four_conv_res_block.4} parent=5 // pred_check
      %p580 = pneg %p579
    $region62: #{four_conv_res_block.4} parent=5 // pred_check_branch
      %582 = sbr.rel (%p580) target = $region64
    $region63: #{four_conv_res_block.4} parent=5 // pred_region
      %s583 = ssub.s32 %s13, 2
      // Predicated region
      $region65: #{four_conv_res_block.4} parent=63 // pred_check
        %p584 = pneg %p152
      $region66: #{four_conv_res_block.4} parent=63 // pred_check_branch
        %586 = sbr.rel (%p584) target = $region68
      $region67: #{four_conv_res_block.4} parent=63 // pred_region
        %p587 = scmp.lt.s32.totalorder %s19, 1
        %s588 = scalar_select %p587, %s19, 1
        %s589 = smul.addr %s588, 2
        %s590 = smul.addr %s589, 4
        %s591 = scalar_lea.vmem %s5, %s590
      $region68: #{four_conv_res_block.4} parent=63 // pred_fallthru
        _
    $region64: #{four_conv_res_block.4} parent=5 // pred_fallthru
      _
  $region6: #{four_conv_res_block.4} parent=0 // loop_footer
    %s17 = sadd.s32 1, %s13
  $region7: #{four_conv_res_block.4} parent=0 // loop_footer_branch
    %12 = sbr.rel target = $region3
  $region8: #{four_conv_res_block.4} parent=0 // loop_exit
    _

</llo_original>
